<compile_context>
chip_gen: v6e
topology: v6e:2x2x1
jax: 0.10.0
libtpu: 0.0.40
codegen_flags: <defaults>
</compile_context>

<pallas_src>
from typing import NamedTuple, Optional

import jax
import jax.numpy as jnp
from jax.experimental import pallas as pl
from jax.experimental.pallas import tpu as pltpu

LANE = 128  # TPU vreg lane width


def _round_up(x, m):
    return ((x + m - 1) // m) * m


def _round_down(x, m):
    return (x // m) * m


def _vmem_capacity_bytes():
    """Per-core VMEM capacity; conservative fallback if the query fails."""
    try:
        return int(pltpu.get_tpu_info().vmem_capacity_bytes)
    except Exception:
        return 64 << 20  # v7x per-TC VMEM (smallest of the fleet) — safe floor


def _spec(block_shape, index_map, buffers=None):
    """BlockSpec helper; falls back gracefully if pipeline_mode is unsupported."""
    if buffers is not None:
        try:
            return pl.BlockSpec(block_shape, index_map,
                                pipeline_mode=pl.Buffered(buffers))
        except Exception:
            pass
    return pl.BlockSpec(block_shape, index_map)


# --------------------------------------------------------------------------
# Kernel
# --------------------------------------------------------------------------
def sine_layer_kernel(x_ref, w_ref, b_ref, o_ref):
    # x_ref: (tm, in_p)   w_ref: (in_p, tn)   b_ref: (1, tn) f32
    # w0 is pre-folded into w/b, so:  y = sin(x @ Wt + b)
    z = jnp.dot(x_ref[...], w_ref[...], preferred_element_type=jnp.float32)
    z = z + b_ref[...]                     # bias broadcast over rows, f32
    o_ref[...] = jnp.sin(z).astype(o_ref.dtype)


# --------------------------------------------------------------------------
# One-time parameter preparation (hoisted out of the hot path)
# --------------------------------------------------------------------------
class SineLayerParams(NamedTuple):
    wt: jax.Array        # (in_p, out_p) = (w0 * W)^T, feature-padded, maybe bf16
    b: jax.Array         # (1, out_p) f32 = w0 * bias, feature-padded
    in_features: int
    out_features: int


def prepare_sine_layer_params(weight, bias, w0, *, stream_dtype=None):
    """Fold w0 into W/b, transpose, pad features to multiples of 128, cast once.

    weight: (out_f, in_f) (PyTorch convention); bias: (out_f,)
    """
    out_f, in_f = weight.shape
    in_p = _round_up(in_f, LANE)
    out_p = _round_up(out_f, LANE)

    wt = (w0 * weight).T                                  # (in_f, out_f)
    if (in_p, out_p) != (in_f, out_f):
        wt = jnp.pad(wt, ((0, in_p - in_f), (0, out_p - out_f)))
    if stream_dtype is not None:
        wt = wt.astype(stream_dtype)

    b = (w0 * bias).astype(jnp.float32)
    if out_p != out_f:
        b = jnp.pad(b, (0, out_p - out_f))
    b = b.reshape(1, out_p)

    return SineLayerParams(wt=wt, b=b, in_features=in_f, out_features=out_f)


# --------------------------------------------------------------------------
# Forward wrapper
# --------------------------------------------------------------------------
def sine_layer(x, params: SineLayerParams, *, tm: Optional[int] = None,
               stream_dtype=None, out_dtype=None):
    """SIREN sine layer forward: sin(w0 * (x @ W^T + b)).

    x: (N, in_f). params: from prepare_sine_layer_params (weight already
    transposed, w0-folded, feature-padded, optionally bf16).
    """
    N, in_f = x.shape
    assert in_f == params.in_features, "x feature dim does not match params"
    out_f = params.out_features
    wt, b = params.wt, params.b
    in_p, out_p = wt.shape

    if out_dtype is None:
        out_dtype = x.dtype

    # Feature padding of x only when in_f is not a multiple of 128 (rows are
    # NEVER padded — the last partial row tile is masked by Pallas).
    if in_p != in_f:
        x = jnp.pad(x, ((0, 0), (0, in_p - in_f)))
    if stream_dtype is not None and x.dtype != stream_dtype:
        x = x.astype(stream_dtype)

    xb = jnp.dtype(x.dtype).itemsize
    wb = jnp.dtype(wt.dtype).itemsize
    ob = jnp.dtype(out_dtype).itemsize

    # ---- per-generation VMEM budget ---------------------------------------
    capacity = _vmem_capacity_bytes()         # 64 MiB on v7x, 128 MiB on v5e/v6e
    budget = int(capacity * 0.75)             # headroom for Mosaic scratch

    # ---- output-column tiling: keep (a column slab of) W resident ---------
    w_bytes = in_p * out_p * wb
    if w_bytes <= budget // 2:
        tn = out_p                            # whole W resident
        w_buffers = 1                         # single-buffered (index map const)
    else:
        tn = max(LANE, _round_down((budget // 4) // (in_p * wb), LANE))
        tn = min(tn, out_p)
        w_buffers = None                      # default double-buffer (varies w/ j)
    grid_n = pl.cdiv(out_p, tn)
    w_resident = (1 if w_buffers == 1 else 2) * in_p * tn * wb

    # ---- adaptive row tile --------------------------------------------------
    per_row = 2 * in_p * xb + 2 * tn * ob     # double-buffered x / out tiles
    remaining = max(budget - w_resident - 2 * tn * 4, per_row * LANE)
    tm_vmem = max(LANE, _round_down(remaining // per_row, LANE))
    if tm is None:
        tm = _round_up((4 << 20) // max(1, in_p * xb), LANE)   # ~4 MiB x buffer
    tm_eff = max(LANE, min(_round_up(tm, LANE), tm_vmem, 4096))
    # Ensure >= 2 row steps when possible so megacore / pipelining engage.
    half_rows = _round_up(pl.cdiv(N, 2), LANE)
    tm_eff = min(tm_eff, max(LANE, half_rows))
    grid_m = pl.cdiv(N, tm_eff)

    # ---- explicit VMEM limit ------------------------------------------------
    needed = (w_resident + 2 * tm_eff * in_p * xb + 2 * tm_eff * tn * ob
              + 2 * tn * 4)
    vmem_limit = min(int(capacity * 0.9),
                     max(int(needed * 1.25) + (1 << 20), 16 << 20))

    cost = pl.CostEstimate(
        flops=2 * N * in_p * out_p,
        transcendentals=N * out_p,
        bytes_accessed=(N * in_p * xb + in_p * out_p * wb + out_p * 4
                        + N * out_p * ob),
    )

    out = pl.pallas_call(
        sine_layer_kernel,
        out_shape=jax.ShapeDtypeStruct((N, out_p), out_dtype),
        grid_spec=pltpu.PrefetchScalarGridSpec(
            num_scalar_prefetch=0,
            grid=(grid_m, grid_n),
            in_specs=[
                _spec((tm_eff, in_p), lambda i, j: (i, 0)),              # x rows
                _spec((in_p, tn), lambda i, j: (0, j), buffers=w_buffers),  # W slab
                _spec((1, tn), lambda i, j: (0, j), buffers=w_buffers),     # bias
            ],
            out_specs=pl.BlockSpec((tm_eff, tn), lambda i, j: (i, j)),
        ),
        compiler_params=pltpu.CompilerParams(
            dimension_semantics=("parallel", "parallel"),
            vmem_limit_bytes=vmem_limit,
        ),
        cost_estimate=cost,
    )(x, wt, b)

    if out_p != out_f:
        out = out[:, :out_f]
    return out


# --------------------------------------------------------------------------
# SIREN-style init (matches SineLayer.init_weights, PyTorch convention)
# --------------------------------------------------------------------------
def init_sine_layer_params(key, in_features, out_features, is_first=False,
                           w0=30.0):
    wkey, bkey = jax.random.split(key)
    if is_first:
        bound_w = 1.0 / in_features
    else:
        bound_w = float(jnp.sqrt(6.0 / in_features)) / w0
    weight = jax.random.uniform(
        wkey, (out_features, in_features), jnp.float32,
        minval=-bound_w, maxval=bound_w)
    # nn.Linear default bias init: U(-1/sqrt(in_features), 1/sqrt(in_features))
    bound_b = 1.0 / float(jnp.sqrt(in_features))
    bias = jax.random.uniform(
        bkey, (out_features,), jnp.float32, minval=-bound_b, maxval=bound_b)
    return weight, bias


if __name__ == "__main__":
    key = jax.random.PRNGKey(0)
    xkey, pkey = jax.random.split(key)

    # Small shapes: N is NOT a multiple of the row tile (exercises the masked
    # last partial tile), features < 128 (exercises the feature padding path).
    N, in_features, out_features = 200, 32, 32
    w0 = 30.0

    x = jax.random.normal(xkey, (N, in_features), jnp.float32)
    weight, bias = init_sine_layer_params(
        pkey, in_features, out_features, is_first=True, w0=w0)

    # Snap x and (w0 * W) onto the bf16 grid so the correctness check is
    # insensitive to MXU matmul precision mode (bf16x1/x3/f32 all give exact
    # products for bf16-representable operands) and so the bf16 streaming path
    # can be checked against the same reference.
    x = x.astype(jnp.bfloat16).astype(jnp.float32)
    weight = ((w0 * weight).astype(jnp.bfloat16).astype(jnp.float32)) / w0

    # Reference = original module semantics: sin(w0 * (x @ W^T + b))
    ref = jnp.sin(w0 * (x @ weight.T + bias))

    # ---- f32 path -----------------------------------------------------------
    params = prepare_sine_layer_params(weight, bias, w0)
    out = jax.block_until_ready(sine_layer(x, params))
    assert out.shape == (N, out_features)
    err = float(jnp.max(jnp.abs(out - ref)))
    assert jnp.allclose(out, ref, atol=1e-3, rtol=1e-3), err

    # ---- bf16 streaming path (MXU operands bf16; accumulate + sin in f32) ---
    params_bf = prepare_sine_layer_params(weight, bias, w0,
                                          stream_dtype=jnp.bfloat16)
    out_bf = jax.block_until_ready(
        sine_layer(x, params_bf, stream_dtype=jnp.bfloat16,
                   out_dtype=jnp.float32))
    assert out_bf.shape == (N, out_features)
    err_bf = float(jnp.max(jnp.abs(out_bf - ref)))
    assert jnp.allclose(out_bf, ref, atol=1e-3, rtol=1e-3), err_bf

    print("KERNEL_OK")
</pallas_src>

<mosaic_0001>
module attributes {stable_mosaic.version = 11 : i64} {
  func.func @sine_layer_kernel(%arg0: i32, %arg1: i32, %arg2: memref<128x128xf32, #tpu.memory_space<vmem>>, %arg3: memref<128x128xf32, #tpu.memory_space<vmem>>, %arg4: memref<1x128xf32, #tpu.memory_space<vmem>>, %arg5: memref<128x128xf32, #tpu.memory_space<vmem>>) attributes {dimension_semantics = [#tpu.dimension_semantics<parallel>, #tpu.dimension_semantics<parallel>], iteration_bounds = array<i64: 2, 1>, scalar_prefetch = 0 : i64, scratch_operands = 0 : i64, tpu.core_type = #tpu.core_type<tc>, window_params = [{transform_indices = @transform_0, window_bounds = array<i64: 128, 128>}, {pipeline_mode = #tpu.pipeline_mode<synchronous>, transform_indices = @transform_1, window_bounds = array<i64: 128, 128>}, {pipeline_mode = #tpu.pipeline_mode<synchronous>, transform_indices = @transform_2, window_bounds = array<i64: 1, 128>}, {transform_indices = @transform_3, window_bounds = array<i64: 128, 128>}]} {
    %c0 = arith.constant 0 : index
    %c0_0 = arith.constant 0 : index
    %0 = vector.load %arg2[%c0, %c0_0] : memref<128x128xf32, #tpu.memory_space<vmem>>, vector<128x128xf32>
    %c0_1 = arith.constant 0 : index
    %c0_2 = arith.constant 0 : index
    %1 = vector.load %arg3[%c0_1, %c0_2] : memref<128x128xf32, #tpu.memory_space<vmem>>, vector<128x128xf32>
    %cst = arith.constant dense<0.000000e+00> : vector<128x128xf32>
    %2 = tpu.matmul %0, %1, %cst {dimension_numbers = #tpu.dot_dimension_numbers<[1], [0], [0], [1], [0, 0, 1, 1], [], []>} : vector<128x128xf32>, vector<128x128xf32>, vector<128x128xf32> -> vector<128x128xf32>
    %c0_3 = arith.constant 0 : index
    %c0_4 = arith.constant 0 : index
    %3 = vector.load %arg4[%c0_3, %c0_4] : memref<1x128xf32, #tpu.memory_space<vmem>>, vector<1x128xf32>
    %4 = vector.broadcast %3 : vector<1x128xf32> to vector<128x128xf32>
    %5 = arith.addf %2, %4 : vector<128x128xf32>
    %6 = math.sin %5 : vector<128x128xf32>
    %c0_5 = arith.constant 0 : index
    %c0_6 = arith.constant 0 : index
    %7 = vector.load %arg5[%c0_5, %c0_6] : memref<128x128xf32, #tpu.memory_space<vmem>>, vector<128x128xf32>
    tpu.vector_store %arg5[%c0_5, %c0_6], %6 {strides = array<i32>} : memref<128x128xf32, #tpu.memory_space<vmem>>, vector<128x128xf32>,
    return
  }
  func.func @transform_0(%arg0: i32, %arg1: i32) -> (i32, i32) {
    %c0_i32 = arith.constant 0 : i32
    %c0_i32_0 = arith.constant 0 : i32
    return %arg0, %c0_i32 : i32, i32
  }
  func.func @transform_1(%arg0: i32, %arg1: i32) -> (i32, i32) {
    %c0_i32 = arith.constant 0 : i32
    %c0_i32_0 = arith.constant 0 : i32
    return %c0_i32, %arg1 : i32, i32
  }
  func.func @transform_2(%arg0: i32, %arg1: i32) -> (i32, i32) {
    %c0_i32 = arith.constant 0 : i32
    %c0_i32_0 = arith.constant 0 : i32
    return %c0_i32, %arg1 : i32, i32
  }
  func.func @transform_3(%arg0: i32, %arg1: i32) -> (i32, i32) {
    %c0_i32 = arith.constant 0 : i32
    return %arg0, %arg1 : i32, i32
  }
}

</mosaic_0001>

<llo_original>
// kernel: tpu_custom_call.1
$region0: #{tpu_custom_call.1}
  #allocation0 [shape = 'u32[]', space=smem, size = 0x4, offset = 0x4, fixed_abs, tag = 'smem constant byte address 0x4 - core index']
  #allocation1 [shape = 'u32[144,128]{1,0:T(1,128)}', space=vmem, size = 0x12000, scoped, tag = 'internal scratch']
  %s0 = inlined_call_operand.hbm [shape: f32[200,128], index: 0, kind: input, shape index: {}]
  %s1 = inlined_call_operand.hbm [shape: f32[128,128], index: 1, kind: input, shape index: {}]
  %s2 = inlined_call_operand.vmem [shape: f32[1,128], index: 2, kind: input, shape index: {}]
  %s3 = inlined_call_operand.hbm [shape: f32[200,128], index: 3, kind: output, shape index: {}]
  %s4 = sld [smem:[#allocation0]]
  $region53: #{tpu_custom_call.1} parent=0
    _
  %s6 = ssub.s32 1, %s4
  %s7 = scalar_select 0, %s6, %s4
  $region1: #{tpu_custom_call.1} parent=0
    #allocation2 [shape = 'u8[131072]{0}', space=vmem, size = 0x20000, scoped, tag = 'input window, operand 0']
    #allocation3 [shape = 's32[2]{0}', space=sflag, size = 0x8, scoped, tag = 'scoped memory for tpu_custom_call.1']
    #allocation4 [shape = 's32[2]{0}', space=sflag, size = 0x8, scoped, tag = 'scoped memory for tpu_custom_call.1']
    #allocation5 [shape = 'u8[65536]{0}', space=vmem, size = 0x10000, scoped, tag = 'input window, operand 1, single buffered']
    #allocation6 [shape = 's32[1]{0}', space=sflag, size = 0x4, scoped, tag = 'scoped memory for tpu_custom_call.1']
    #allocation7 [shape = 'u8[131072]{0}', space=vmem, size = 0x20000, scoped, tag = 'output window, operand 0']
    %8 = vsyncpa [#allocation3], 0
    %s9 = scalar_lea.sflag [#allocation3], 1
    %10 = vsyncpa %s9, 0
    %11 = vsyncpa [#allocation6], 0
    %12 = vsyncpa [#allocation4], 0
    %s13 = scalar_lea.sflag [#allocation4], 1
    %14 = vsyncpa %s13, 0
    loop: start=0, step=1, limit=4
    $region2: #{tpu_custom_call.1} parent=1 // loop_pre_header
      _
    $region3: #{tpu_custom_call.1} parent=1 // loop_header
      %s16 = sphi 0, %s20
      %p17 = scmp.ge.s32.totalorder %s16, 4
      %s23 = sphi 0, %s35
      %s24 = sphi 0, %s31
      %s25 = sphi 0, %s23
      %s26 = sphi 0, %s24
      %s27 = sphi 0, %s25
      %s28 = sphi 0, %s26
      %s38 = sphi 0, %s40
      %s41 = sphi 0, %s38
      %s42 = sphi 0, %s41
      %s58 = sphi 0, %s42
      %s64 = sphi 0, %s66
      %s67 = sphi 0, %s64
      %s68 = sphi 0, %s67
      %s84 = sphi 0, %s68
      %s90 = sphi 0, %s92
      %s93 = sphi 0, %s90
      %s94 = sphi 0, %s93
      %s110 = sphi 0, %s94
      %s118 = sphi 0, %s120
      %s121 = sphi 0, %s118
      %s122 = sphi 0, %s121
      %s138 = sphi 0, %s122
    $region4: #{tpu_custom_call.1} parent=1 // loop_header_branch
      %19 = sbr.rel (%p17) target = $region8
    $region5: #{tpu_custom_call.1} parent=1 // loop_body
      %s21 = ssub.s32 %s16, 1
      %s22 = ssub.s32 %s16, 2
      %s29 = sadd.s32 1, %s24
      %p30 = scmp.ge.s32.totalorder %s29, 1
      %s31 = scalar_select %p30, 0, %s29
      %s32 = sadd.s32 1, %s23
      %s33 = scalar_select %p30, %s32, %s23
      %p34 = scmp.ge.s32.totalorder %s33, 2
      %s35 = scalar_select %p34, 0, %s33
      %s36 = ssub.s32 %s23, %s35
      %p37 = scmp.eq.s32.totalorder %s36, 0
      %s39 = sadd.s32 %s38, 1
      %s40 = scalar_select %p37, %s38, %s39
      %p43 = pneg %p37
      %p44 = scmp.eq.s32.totalorder %s16, 1
      %p45 = por %p43, %p44
      %p46 = scmp.ne.s32.totalorder %s38, %s41
      %p47 = scmp.eq.s32.totalorder %s16, 0
      %p48 = por %p46, %p47
      %p49 = scmp.ne.s32.totalorder %s38, %s41
      %p50 = scmp.eq.s32.totalorder %s21, 1
      %p51 = por %p49, %p50
      %p52 = scmp.ne.s32.totalorder %s41, %s42
      %p53 = scmp.eq.s32.totalorder %s21, 0
      %p54 = por %p52, %p53
      %p55 = scmp.ne.s32.totalorder %s41, %s42
      %p56 = scmp.eq.s32.totalorder %s22, 1
      %p57 = por %p55, %p56
      %p59 = scmp.ne.s32.totalorder %s42, %s58
      %p60 = scmp.eq.s32.totalorder %s22, 0
      %p61 = por %p59, %p60
      %s62 = ssub.s32 %s24, %s31
      %p63 = scmp.eq.s32.totalorder %s62, 0
      %s65 = sadd.s32 %s64, 1
      %s66 = scalar_select %p63, %s64, %s65
      %p69 = pneg %p63
      %p70 = scmp.eq.s32.totalorder %s16, 1
      %p71 = por %p69, %p70
      %p72 = scmp.ne.s32.totalorder %s64, %s67
      %p73 = scmp.eq.s32.totalorder %s16, 0
      %p74 = por %p72, %p73
      %p75 = scmp.ne.s32.totalorder %s64, %s67
      %p76 = scmp.eq.s32.totalorder %s21, 1
      %p77 = por %p75, %p76
      %p78 = scmp.ne.s32.totalorder %s67, %s68
      %p79 = scmp.eq.s32.totalorder %s21, 0
      %p80 = por %p78, %p79
      %p81 = scmp.ne.s32.totalorder %s67, %s68
      %p82 = scmp.eq.s32.totalorder %s22, 1
      %p83 = por %p81, %p82
      %p85 = scmp.ne.s32.totalorder %s68, %s84
      %p86 = scmp.eq.s32.totalorder %s22, 0
      %p87 = por %p85, %p86
      %s88 = ssub.s32 %s24, %s31
      %p89 = scmp.eq.s32.totalorder %s88, 0
      %s91 = sadd.s32 %s90, 1
      %s92 = scalar_select %p89, %s90, %s91
      %p95 = pneg %p89
      %p96 = scmp.eq.s32.totalorder %s16, 1
      %p97 = por %p95, %p96
      %p98 = scmp.ne.s32.totalorder %s90, %s93
      %p99 = scmp.eq.s32.totalorder %s16, 0
      %p100 = por %p98, %p99
      %p101 = scmp.ne.s32.totalorder %s90, %s93
      %p102 = scmp.eq.s32.totalorder %s21, 1
      %p103 = por %p101, %p102
      %p104 = scmp.ne.s32.totalorder %s93, %s94
      %p105 = scmp.eq.s32.totalorder %s21, 0
      %p106 = por %p104, %p105
      %p107 = scmp.ne.s32.totalorder %s93, %s94
      %p108 = scmp.eq.s32.totalorder %s22, 1
      %p109 = por %p107, %p108
      %p111 = scmp.ne.s32.totalorder %s94, %s110
      %p112 = scmp.eq.s32.totalorder %s22, 0
      %p113 = por %p111, %p112
      %s114 = ssub.s32 %s23, %s35
      %s115 = ssub.s32 %s24, %s31
      %s116 = sor.u32 %s114, %s115
      %p117 = scmp.eq.s32.totalorder %s116, 0
      %s119 = sadd.s32 %s118, 1
      %s120 = scalar_select %p117, %s118, %s119
      %p123 = pneg %p117
      %p124 = scmp.eq.s32.totalorder %s16, 1
      %p125 = por %p123, %p124
      %p126 = scmp.ne.s32.totalorder %s118, %s121
      %p127 = scmp.eq.s32.totalorder %s16, 0
      %p128 = por %p126, %p127
      %p129 = scmp.ne.s32.totalorder %s118, %s121
      %p130 = scmp.eq.s32.totalorder %s21, 1
      %p131 = por %p129, %p130
      %p132 = scmp.ne.s32.totalorder %s121, %s122
      %p133 = scmp.eq.s32.totalorder %s21, 0
      %p134 = por %p132, %p133
      %p135 = scmp.ne.s32.totalorder %s121, %s122
      %p136 = scmp.eq.s32.totalorder %s22, 1
      %p137 = por %p135, %p136
      %p139 = scmp.ne.s32.totalorder %s122, %s138
      %p140 = scmp.eq.s32.totalorder %s22, 0
      %p141 = por %p139, %p140
      %p142 = scmp.le.s32.totalorder 1, %s16
      %p143 = scmp.lt.s32.totalorder %s16, 3
      %p144 = pnand %p142, %p143
      %p145 = pneg %p144
      // Predicated region
      $region9: #{tpu_custom_call.1} parent=5 // pred_check
        _
      $region10: #{tpu_custom_call.1} parent=5 // pred_check_branch
        %147 = sbr.rel (%p144) target = $region12
      $region11: #{tpu_custom_call.1} parent=5 // pred_region
        %s148 = ssub.s32 %s16, 1
        // Predicated region
        $region13: #{tpu_custom_call.1} parent=11 // pred_check
          %p149 = pneg %p80
        $region14: #{tpu_custom_call.1} parent=11 // pred_check_branch
          %151 = sbr.rel (%p149) target = $region16
        $region15: #{tpu_custom_call.1} parent=11 // pred_region
          %s153 = ssub.s32 2048, 2048
          %154 = vsyncadd [#allocation6], %s153
          %s155 = smul.addr %s26, 128
          %s156 = scalar_lea.hbm %s1, %s155
          %s157 = sshll.u32 [#allocation5], 4
          %s158 = int_to_ptr.vmem [resolvable:$true] %s157
          %163 = dma.hbm_to_vmem [thread:$0]  %s156, 2048, %s158, [#allocation6], 128, 128, 8
        $region16: #{tpu_custom_call.1} parent=11 // pred_fallthru
          _
        // Predicated region
        $region17: #{tpu_custom_call.1} parent=11 // pred_check
          %p164 = pneg %p106
        $region18: #{tpu_custom_call.1} parent=11 // pred_check_branch
          %166 = sbr.rel (%p164) target = $region20
        $region19: #{tpu_custom_call.1} parent=11 // pred_region
          %p167 = scmp.lt.s32.totalorder %s26, 0
          %s168 = scalar_select %p167, %s26, 0
          %s169 = scalar_lea.vmem %s2, %s168
        $region20: #{tpu_custom_call.1} parent=11 // pred_fallthru
          _
      $region12: #{tpu_custom_call.1} parent=5 // pred_fallthru
        _
      %p170 = scmp.lt.s32.totalorder %s16, 2
      // Predicated region
      $region21: #{tpu_custom_call.1} parent=5 // pred_check
        %p171 = pneg %p170
      $region22: #{tpu_custom_call.1} parent=5 // pred_check_branch
        %173 = sbr.rel (%p171) target = $region24
      $region23: #{tpu_custom_call.1} parent=5 // pred_region
        // Predicated region
        $region25: #{tpu_custom_call.1} parent=23 // pred_check
          %p174 = pneg %p48
        $region26: #{tpu_custom_call.1} parent=23 // pred_check_branch
          %176 = sbr.rel (%p174) target = $region28
        $region27: #{tpu_custom_call.1} parent=23 // pred_region
          %s177 = sand.u32 %s38, 1
          %s178 = scalar_lea.sflag [#allocation3], %s177
          %s179 = sand.u32 %s38, 1
          %s180 = smul.addr %s179, 128
          %s181 = scalar_lea.vmem [#allocation2], %s180
          %s182 = smul.u32 16, %s23
          %s183 = ssub.s32 25, %s182
          %p184 = scmp.lt.s32.totalorder %s183, 16
          %s185 = scalar_select %p184, %s183, 16
          %s186 = smul.u32 128, %s185
          %s188 = ssub.s32 2048, %s186
          %189 = vsyncadd %s178, %s188
          %p190 = scmp.ne.s32.totalorder 0, %s186
          %s191 = smul.addr %s182, 128
          %s192 = scalar_lea.hbm %s0, %s191
          %s193 = smul.u32 8, %s185
          %s194 = sshll.u32 %s181, 4
          %s195 = int_to_ptr.vmem [resolvable:$true] %s194
          %s196 = sshll.u32 %s193, 4
          %200 = dma.hbm_to_vmem [thread:$0]  (%p190), %s192, %s196, %s195, %s178, 128, 128, 8
        $region28: #{tpu_custom_call.1} parent=23 // pred_fallthru
          _
      $region24: #{tpu_custom_call.1} parent=5 // pred_fallthru
        _
      %p201 = scmp.le.s32.totalorder 1, %s16
      %p202 = scmp.lt.s32.totalorder %s16, 3
      %p203 = pnand %p201, %p202
      %p204 = pneg %p203
      // Predicated region
      $region29: #{tpu_custom_call.1} parent=5 // pred_check
        _
      $region30: #{tpu_custom_call.1} parent=5 // pred_check_branch
        %206 = sbr.rel (%p203) target = $region32
      $region31: #{tpu_custom_call.1} parent=5 // pred_region
        %s207 = ssub.s32 %s16, 1
        %s208 = sand.u32 %s41, 1
        %s209 = scalar_lea.sflag [#allocation3], %s208
        %s210 = sand.u32 %s41, 1
        %s211 = smul.addr %s210, 128
        %s212 = scalar_lea.vmem [#allocation2], %s211
        // Predicated region
        $region33: #{tpu_custom_call.1} parent=31 // pred_check
          %p213 = pneg %p54
        $region34: #{tpu_custom_call.1} parent=31 // pred_check_branch
          %215 = sbr.rel (%p213) target = $region36
        $region35: #{tpu_custom_call.1} parent=31 // pred_region
          %216 = dma.done %s209, 2048
        $region36: #{tpu_custom_call.1} parent=31 // pred_fallthru
          _
        // Predicated region
        $region37: #{tpu_custom_call.1} parent=31 // pred_check
          %p217 = pneg %p80
        $region38: #{tpu_custom_call.1} parent=31 // pred_check_branch
          %219 = sbr.rel (%p217) target = $region40
        $region39: #{tpu_custom_call.1} parent=31 // pred_region
          %220 = dma.done [#allocation6], 2048
        $region40: #{tpu_custom_call.1} parent=31 // pred_fallthru
          _
        %s221 = sand.u32 %s41, 1
        %s222 = scalar_lea.sflag [#allocation3], %s221
        %s223 = sand.u32 %s41, 1
        %s224 = smul.addr %s223, 128
        %s225 = scalar_lea.vmem [#allocation2], %s224
        %p226 = pneg %p54
        %p227 = pneg %p51
        %p228 = pneg %p80
        %p229 = pneg %p77
        %p230 = scmp.lt.s32.totalorder %s26, 0
        %s231 = scalar_select %p230, %s26, 0
        %s232 = scalar_lea.vmem %s2, %s231
        %p233 = pneg %p106
        %p234 = pneg %p103
        %p235 = pneg %p134
        %p236 = pneg %p131
        %s237 = sand.u32 %s121, 1
        %s238 = scalar_lea.sflag [#allocation4], %s237
        %s239 = sand.u32 %s121, 1
        %s240 = smul.addr %s239, 128
        %s241 = scalar_lea.vmem [#allocation7], %s240
        %s242 = smul.u32 16, %s25
        %s243 = ssub.s32 25, %s242
        %p244 = scmp.lt.s32.totalorder %s243, 16
        %s245 = scalar_select %p244, %s243, 16
        %s246 = smul.u32 128, %s245
        %p247 = scmp.lt.s32.totalorder %s26, 0
        %s248 = scalar_select %p247, %s26, 0
        %s249 = scalar_lea.vmem %s2, %s248
        %s250 = smul.u32 16, %s25
        %s251 = ssub.s32 25, %s250
        %p252 = scmp.lt.s32.totalorder %s251, 16
        %s253 = scalar_select %p252, %s251, 16
        %s254 = smul.u32 128, %s253
        %v255 = vld [vmem:[%s212] sm:$0xff]
        %v256 = vld [vmem:[%s212 + $0x8] sm:$0xff]
        %v257 = vld [vmem:[%s212 + $0x10] sm:$0xff]
        %v258 = vld [vmem:[%s212 + $0x18] sm:$0xff]
        %v259 = vld [vmem:[%s212 + $0x20] sm:$0xff]
        %v260 = vld [vmem:[%s212 + $0x28] sm:$0xff]
        %v261 = vld [vmem:[%s212 + $0x30] sm:$0xff]
        %v262 = vld [vmem:[%s212 + $0x38] sm:$0xff]
        %v263 = vld [vmem:[%s212 + $0x40] sm:$0xff]
        %v264 = vld [vmem:[%s212 + $0x48] sm:$0xff]
        %v265 = vld [vmem:[%s212 + $0x50] sm:$0xff]
        %v266 = vld [vmem:[%s212 + $0x58] sm:$0xff]
        %v267 = vld [vmem:[%s212 + $0x60] sm:$0xff]
        %v268 = vld [vmem:[%s212 + $0x68] sm:$0xff]
        %v269 = vld [vmem:[%s212 + $0x70] sm:$0xff]
        %v270 = vld [vmem:[%s212 + $0x78] sm:$0xff]
        %v271 = vld [vmem:[#allocation5] sm:$0xff]
        %v272 = vld [vmem:[#allocation5 + $0x8] sm:$0xff]
        %v273 = vld [vmem:[#allocation5 + $0x10] sm:$0xff]
        %v274 = vld [vmem:[#allocation5 + $0x18] sm:$0xff]
        %v275 = vld [vmem:[#allocation5 + $0x20] sm:$0xff]
        %v276 = vld [vmem:[#allocation5 + $0x28] sm:$0xff]
        %v277 = vld [vmem:[#allocation5 + $0x30] sm:$0xff]
        %v278 = vld [vmem:[#allocation5 + $0x38] sm:$0xff]
        %v279 = vld [vmem:[#allocation5 + $0x40] sm:$0xff]
        %v280 = vld [vmem:[#allocation5 + $0x48] sm:$0xff]
        %v281 = vld [vmem:[#allocation5 + $0x50] sm:$0xff]
        %v282 = vld [vmem:[#allocation5 + $0x58] sm:$0xff]
        %v283 = vld [vmem:[#allocation5 + $0x60] sm:$0xff]
        %v284 = vld [vmem:[#allocation5 + $0x68] sm:$0xff]
        %v285 = vld [vmem:[#allocation5 + $0x70] sm:$0xff]
        %v286 = vld [vmem:[#allocation5 + $0x78] sm:$0xff]
        %v287 = vld [vmem:[%s249] sm:$0x1]
        %v289 = vlaneseq
        %v290 = vshrl.u32 %v289, 7
        %v291 = vsub.s32 0, %v290
        %v292 = vrot.slane %v287, %v291
        %294 = vmatprep.subr.mxu0 0.0
        %295 = vmatpush1.msra.mxu0 %v286
        %296 = vmatprep.subr.mxu0 0.0
        %297 = vmatpush1.msra.mxu0 %v285
        %298 = vmatprep.subr.mxu0 0.0
        %299 = vmatpush1.msra.mxu0 %v284
        %300 = vmatprep.subr.mxu0 0.0
        %301 = vmatpush1.msra.mxu0 %v283
        %302 = vmatprep.subr.mxu0 0.0
        %303 = vmatpush1.msra.mxu0 %v282
        %304 = vmatprep.subr.mxu0 0.0
        %305 = vmatpush1.msra.mxu0 %v281
        %306 = vmatprep.subr.mxu0 0.0
        %307 = vmatpush1.msra.mxu0 %v280
        %308 = vmatprep.subr.mxu0 0.0
        %309 = vmatpush1.msra.mxu0 %v279
        %310 = vmatprep.subr.mxu0 0.0
        %311 = vmatpush1.msra.mxu0 %v278
        %312 = vmatprep.subr.mxu0 0.0
        %313 = vmatpush1.msra.mxu0 %v277
        %314 = vmatprep.subr.mxu0 0.0
        %315 = vmatpush1.msra.mxu0 %v276
        %316 = vmatprep.subr.mxu0 0.0
        %317 = vmatpush1.msra.mxu0 %v275
        %318 = vmatprep.subr.mxu0 0.0
        %319 = vmatpush1.msra.mxu0 %v274
        %320 = vmatprep.subr.mxu0 0.0
        %321 = vmatpush1.msra.mxu0 %v273
        %322 = vmatprep.subr.mxu0 0.0
        %323 = vmatpush1.msra.mxu0 %v272
        %324 = vmatprep.subr.mxu0 0.0
        %325 = vmatpush1.msra.mxu0 %v271
        %326 = vmatprep.subr.mxu0 0.0
        %327 = vmatpush2.msra.mxu0 0.0
        %328 = vmatprep.subr.mxu0 0.0
        %329 = vmatpush2.msra.mxu0 0.0
        %330 = vmatprep.subr.mxu0 0.0
        %331 = vmatpush2.msra.mxu0 0.0
        %332 = vmatprep.subr.mxu0 0.0
        %333 = vmatpush2.msra.mxu0 0.0
        %334 = vmatprep.subr.mxu0 0.0
        %335 = vmatpush2.msra.mxu0 0.0
        %336 = vmatprep.subr.mxu0 0.0
        %337 = vmatpush2.msra.mxu0 0.0
        %338 = vmatprep.subr.mxu0 0.0
        %339 = vmatpush2.msra.mxu0 0.0
        %340 = vmatprep.subr.mxu0 0.0
        %341 = vmatpush2.msra.mxu0 0.0
        %342 = vmatprep.subr.mxu0 0.0
        %343 = vmatpush2.msra.mxu0 0.0
        %344 = vmatprep.subr.mxu0 0.0
        %345 = vmatpush2.msra.mxu0 0.0
        %346 = vmatprep.subr.mxu0 0.0
        %347 = vmatpush2.msra.mxu0 0.0
        %348 = vmatprep.subr.mxu0 0.0
        %349 = vmatpush2.msra.mxu0 0.0
        %350 = vmatprep.subr.mxu0 0.0
        %351 = vmatpush2.msra.mxu0 0.0
        %352 = vmatprep.subr.mxu0 0.0
        %353 = vmatpush2.msra.mxu0 0.0
        %354 = vmatprep.subr.mxu0 0.0
        %355 = vmatpush2.msra.mxu0 0.0
        %356 = vmatprep.subr.mxu0 0.0
        %357 = vmatpush2.msra.mxu0 0.0
        %358 = vmatprep.mubr.f32.mxu0 0.0
        %359 = vmatmul.mubr.f32.gmra.mxu0 %v255
        %v360 = vpop.f32.mrf.mxu0
        %v361 = vadd.f32 %v292, %v360
        %v362 = vpop.f32.mrf.mxu0
        %363 = vmatprep.mubr.f32.mxu0 0.0
        %364 = vmatmul.mubr.f32.gmra.mxu0 %v256
        %v365 = vpop.f32.mrf.mxu0
        %v366 = vadd.f32 %v292, %v365
        %v367 = vpop.f32.mrf.mxu0
        %368 = vmatprep.mubr.f32.mxu0 0.0
        %369 = vmatmul.mubr.f32.gmra.mxu0 %v257
        %v370 = vpop.f32.mrf.mxu0
        %v371 = vadd.f32 %v292, %v370
        %v372 = vpop.f32.mrf.mxu0
        %373 = vmatprep.mubr.f32.mxu0 0.0
        %374 = vmatmul.mubr.f32.gmra.mxu0 %v258
        %v375 = vpop.f32.mrf.mxu0
        %v376 = vadd.f32 %v292, %v375
        %v377 = vpop.f32.mrf.mxu0
        %378 = vmatprep.mubr.f32.mxu0 0.0
        %379 = vmatmul.mubr.f32.gmra.mxu0 %v259
        %v380 = vpop.f32.mrf.mxu0
        %v381 = vadd.f32 %v292, %v380
        %v382 = vpop.f32.mrf.mxu0
        %383 = vmatprep.mubr.f32.mxu0 0.0
        %384 = vmatmul.mubr.f32.gmra.mxu0 %v260
        %v385 = vpop.f32.mrf.mxu0
        %v386 = vadd.f32 %v292, %v385
        %v387 = vpop.f32.mrf.mxu0
        %388 = vmatprep.mubr.f32.mxu0 0.0
        %389 = vmatmul.mubr.f32.gmra.mxu0 %v261
        %v390 = vpop.f32.mrf.mxu0
        %v391 = vadd.f32 %v292, %v390
        %v392 = vpop.f32.mrf.mxu0
        %393 = vmatprep.mubr.f32.mxu0 0.0
        %394 = vmatmul.mubr.f32.gmra.mxu0 %v262
        %v395 = vpop.f32.mrf.mxu0
        %v396 = vadd.f32 %v292, %v395
        %v397 = vpop.f32.mrf.mxu0
        %398 = vmatprep.mubr.f32.mxu0 0.0
        %399 = vmatmul.mubr.f32.gmra.mxu0 %v263
        %v400 = vpop.f32.mrf.mxu0
        %v401 = vadd.f32 %v292, %v400
        %v402 = vpop.f32.mrf.mxu0
        %403 = vmatprep.mubr.f32.mxu0 0.0
        %404 = vmatmul.mubr.f32.gmra.mxu0 %v264
        %v405 = vpop.f32.mrf.mxu0
        %v406 = vadd.f32 %v292, %v405
        %v407 = vpop.f32.mrf.mxu0
        %408 = vmatprep.mubr.f32.mxu0 0.0
        %409 = vmatmul.mubr.f32.gmra.mxu0 %v265
        %v410 = vpop.f32.mrf.mxu0
        %v411 = vadd.f32 %v292, %v410
        %v412 = vpop.f32.mrf.mxu0
        %413 = vmatprep.mubr.f32.mxu0 0.0
        %414 = vmatmul.mubr.f32.gmra.mxu0 %v266
        %v415 = vpop.f32.mrf.mxu0
        %v416 = vadd.f32 %v292, %v415
        %v417 = vpop.f32.mrf.mxu0
        %418 = vmatprep.mubr.f32.mxu0 0.0
        %419 = vmatmul.mubr.f32.gmra.mxu0 %v267
        %v420 = vpop.f32.mrf.mxu0
        %v421 = vadd.f32 %v292, %v420
        %v422 = vpop.f32.mrf.mxu0
        %423 = vmatprep.mubr.f32.mxu0 0.0
        %424 = vmatmul.mubr.f32.gmra.mxu0 %v268
        %v425 = vpop.f32.mrf.mxu0
        %v426 = vadd.f32 %v292, %v425
        %v427 = vpop.f32.mrf.mxu0
        %428 = vmatprep.mubr.f32.mxu0 0.0
        %429 = vmatmul.mubr.f32.gmra.mxu0 %v269
        %v430 = vpop.f32.mrf.mxu0
        %v431 = vadd.f32 %v292, %v430
        %v432 = vpop.f32.mrf.mxu0
        %433 = vmatprep.mubr.f32.mxu0 0.0
        %434 = vmatmul.mubr.f32.gmra.mxu0 %v270
        %v435 = vpop.f32.mrf.mxu0
        %v436 = vadd.f32 %v292, %v435
        %v437 = vpop.f32.mrf.mxu0
        %438 = vdwg.mxu0
        %v439 = vand.u32 2147483647, %v361
        %vm440 = vcmp.le.f32.partialorder %v439, 0.7853982
        %vm441 = vcmp.lt.s32.totalorder %v361, 0
        %v442 = vand.u32 %v361, 2139095040
        %v443 = vshrl.u32 %v442, 23
        %v444 = vsub.s32 %v443, 127
        %v445 = vand.u32 2147483647, %v361
        %v446 = vand.u32 %v445, 8388607
        %v447 = vor.u32 %v446, 8388608
        %v448 = vsub.s32 0, %v447
        %v449 = vadd.s32 %v444, 1
        %vm450 = vcmp.gt.s32.totalorder %v449, 0
        %v451 = vsel %vm450, %v449, 0
        %v452 = vshrl.u32 %v451, 5
        %v453 = vand.u32 %v451, 31
        %v454 = vsub.s32 32, %v453
        %v455 = vshrl.u32 683565275, %v454
        %v456 = vshll.u32 683565275, %v453
        %v457 = vshrl.u32 2475754826, %v454
        %v458 = vor.u32 %v456, %v457
        %v459 = vshll.u32 2475754826, %v453
        %v460 = vshrl.u32 2131351028, %v454
        %v461 = vor.u32 %v459, %v460
        %v462 = vshll.u32 2131351028, %v453
        %v463 = vshrl.u32 2102212464, %v454
        %v464 = vor.u32 %v462, %v463
        %v465 = vshll.u32 2102212464, %v453
        %v466 = vshrl.u32 920167782, %v454
        %v467 = vor.u32 %v465, %v466
        %v468 = vshll.u32 920167782, %v453
        %v469 = vshrl.u32 1326507024, %v454
        %v470 = vor.u32 %v468, %v469
        %vm471 = vcmp.lt.s32.totalorder %v452, 1
        %vm472 = vcmp.lt.s32.totalorder %v452, 2
        %vm473 = vcmp.lt.s32.totalorder %v452, 3
        %vm474 = vcmp.lt.s32.totalorder %v452, 4
        %v475 = vsel %vm471, %v455, %v458
        %v476 = vsel %vm474, %v464, 2102212464
        %v477 = vsel %vm473, %v461, %v476
        %v478 = vsel %vm472, %v475, %v477
        %v479 = vsel %vm471, %v458, %v461
        %v480 = vsel %vm474, %v467, 920167782
        %v481 = vsel %vm473, %v464, %v480
        %v482 = vsel %vm472, %v479, %v481
        %v483 = vsel %vm471, %v461, %v464
        %v484 = vsel %vm474, %v470, 1326507024
        %v485 = vsel %vm473, %v467, %v484
        %v486 = vsel %vm472, %v483, %v485
        %v487 = vshll.u32 %v447, 8
        %v488 = vmul.u32.u64.compose %v487, %v486
        %v489 = vextract.low.u32 %v488
        %v490 = vextract.high.u32 %v488
        %v491 = vmul.u32.u64.compose %v487, %v482
        %v492 = vextract.low.u32 %v491
        %v493 = vextract.high.u32 %v491
        %v494 = vmul.u32 %v487, %v478
        %v495 = vadd.s32 %v490, %v492
        %vm496 = vc.u32 %v490, %v492
        %v497 = vadd.s32 %v493, 1
        %v498 = vsel %vm496, %v497, %v493
        %v499 = vadd.s32 %v494, %v498
        %v500 = vadd.s32 %v499, 536870912
        %v501 = vshrl.u32 %v500, 30
        %v502 = vshll.u32 %v501, 30
        %v503 = vsub.s32 %v499, %v502
        %vm504 = vcmp.lt.s32.totalorder %v503, 0
        %v505 = vsub.s32 0, %v503
        %v506 = vsel %vm504, %v505, %v503
        %v507 = vclz %v506
        %v508 = vsub.s32 %v507, 2
        %vm509 = vcmp.gt.s32.totalorder 0, %v508
        %v510 = vsel %vm509, 0, %v508
        %v511 = vsub.s32 32, %v510
        %v512 = vshll.u32 %v503, %v510
        %v513 = vshrl.u32 %v495, %v511
        %v514 = vor.u32 %v512, %v513
        %v515 = vsub.s32 4294967266, %v510
        %v516 = vadd.s32 %v515, 127
        %v517 = vshll.u32 %v516, 23
        %v518 = vor.u32 4788187, %v517
        %v519 = vand.u32 2147483647, %v518
        %v521 = vcvt.s32.f32 %v514
        %v522 = vmul.f32 %v521, %v519
        %v523 = vxor.u32 %v522, 2147483648
        %v524 = vsel %vm441, %v523, %v522
        %v525 = vsub.s32 4, %v501
        %v526 = vsel %vm441, %v525, %v501
        %v527 = vsel %vm440, %v361, %v524
        %v528 = vsel %vm440, 0, %v526
        %v529 = vcosq.f32.pop %v527
        %v530 = vsinq.f32.pop %v527
        %vm531 = vweird.f32 %v361
        %v532 = vadd.s32 %v528, 3
        %v533 = vand.u32 %v532, 3
        %vm534 = vcmp.lt.s32.totalorder %v533, 2
        %vm535 = vcmp.eq.s32.totalorder %v533, 0
        %v536 = vxor.u32 %v530, 2147483648
        %v537 = vsel %vm535, %v529, %v536
        %vm538 = vcmp.eq.s32.totalorder %v533, 2
        %v539 = vxor.u32 %v529, 2147483648
        %v540 = vsel %vm538, %v539, %v530
        %v541 = vsel %vm534, %v537, %v540
        %v542 = vsel %vm531, nan, %v541
        %v543 = vand.u32 2147483647, %v366
        %vm544 = vcmp.le.f32.partialorder %v543, 0.7853982
        %vm545 = vcmp.lt.s32.totalorder %v366, 0
        %v546 = vand.u32 %v366, 2139095040
        %v547 = vshrl.u32 %v546, 23
        %v548 = vsub.s32 %v547, 127
        %v549 = vand.u32 2147483647, %v366
        %v550 = vand.u32 %v549, 8388607
        %v551 = vor.u32 %v550, 8388608
        %v552 = vsub.s32 0, %v551
        %v553 = vadd.s32 %v548, 1
        %vm554 = vcmp.gt.s32.totalorder %v553, 0
        %v555 = vsel %vm554, %v553, 0
        %v556 = vshrl.u32 %v555, 5
        %v557 = vand.u32 %v555, 31
        %v558 = vsub.s32 32, %v557
        %v559 = vshrl.u32 683565275, %v558
        %v560 = vshll.u32 683565275, %v557
        %v561 = vshrl.u32 2475754826, %v558
        %v562 = vor.u32 %v560, %v561
        %v563 = vshll.u32 2475754826, %v557
        %v564 = vshrl.u32 2131351028, %v558
        %v565 = vor.u32 %v563, %v564
        %v566 = vshll.u32 2131351028, %v557
        %v567 = vshrl.u32 2102212464, %v558
        %v568 = vor.u32 %v566, %v567
        %v569 = vshll.u32 2102212464, %v557
        %v570 = vshrl.u32 920167782, %v558
        %v571 = vor.u32 %v569, %v570
        %v572 = vshll.u32 920167782, %v557
        %v573 = vshrl.u32 1326507024, %v558
        %v574 = vor.u32 %v572, %v573
        %vm575 = vcmp.lt.s32.totalorder %v556, 1
        %vm576 = vcmp.lt.s32.totalorder %v556, 2
        %vm577 = vcmp.lt.s32.totalorder %v556, 3
        %vm578 = vcmp.lt.s32.totalorder %v556, 4
        %v579 = vsel %vm575, %v559, %v562
        %v580 = vsel %vm578, %v568, 2102212464
        %v581 = vsel %vm577, %v565, %v580
        %v582 = vsel %vm576, %v579, %v581
        %v583 = vsel %vm575, %v562, %v565
        %v584 = vsel %vm578, %v571, 920167782
        %v585 = vsel %vm577, %v568, %v584
        %v586 = vsel %vm576, %v583, %v585
        %v587 = vsel %vm575, %v565, %v568
        %v588 = vsel %vm578, %v574, 1326507024
        %v589 = vsel %vm577, %v571, %v588
        %v590 = vsel %vm576, %v587, %v589
        %v591 = vshll.u32 %v551, 8
        %v592 = vmul.u32.u64.compose %v591, %v590
        %v593 = vextract.low.u32 %v592
        %v594 = vextract.high.u32 %v592
        %v595 = vmul.u32.u64.compose %v591, %v586
        %v596 = vextract.low.u32 %v595
        %v597 = vextract.high.u32 %v595
        %v598 = vmul.u32 %v591, %v582
        %v599 = vadd.s32 %v594, %v596
        %vm600 = vc.u32 %v594, %v596
        %v601 = vadd.s32 %v597, 1
        %v602 = vsel %vm600, %v601, %v597
        %v603 = vadd.s32 %v598, %v602
        %v604 = vadd.s32 %v603, 536870912
        %v605 = vshrl.u32 %v604, 30
        %v606 = vshll.u32 %v605, 30
        %v607 = vsub.s32 %v603, %v606
        %vm608 = vcmp.lt.s32.totalorder %v607, 0
        %v609 = vsub.s32 0, %v607
        %v610 = vsel %vm608, %v609, %v607
        %v611 = vclz %v610
        %v612 = vsub.s32 %v611, 2
        %vm613 = vcmp.gt.s32.totalorder 0, %v612
        %v614 = vsel %vm613, 0, %v612
        %v615 = vsub.s32 32, %v614
        %v616 = vshll.u32 %v607, %v614
        %v617 = vshrl.u32 %v599, %v615
        %v618 = vor.u32 %v616, %v617
        %v619 = vsub.s32 4294967266, %v614
        %v620 = vadd.s32 %v619, 127
        %v621 = vshll.u32 %v620, 23
        %v622 = vor.u32 4788187, %v621
        %v623 = vand.u32 2147483647, %v622
        %v625 = vcvt.s32.f32 %v618
        %v626 = vmul.f32 %v625, %v623
        %v627 = vxor.u32 %v626, 2147483648
        %v628 = vsel %vm545, %v627, %v626
        %v629 = vsub.s32 4, %v605
        %v630 = vsel %vm545, %v629, %v605
        %v631 = vsel %vm544, %v366, %v628
        %v632 = vsel %vm544, 0, %v630
        %v633 = vcosq.f32.pop %v631
        %v634 = vsinq.f32.pop %v631
        %vm635 = vweird.f32 %v366
        %v636 = vadd.s32 %v632, 3
        %v637 = vand.u32 %v636, 3
        %vm638 = vcmp.lt.s32.totalorder %v637, 2
        %vm639 = vcmp.eq.s32.totalorder %v637, 0
        %v640 = vxor.u32 %v634, 2147483648
        %v641 = vsel %vm639, %v633, %v640
        %vm642 = vcmp.eq.s32.totalorder %v637, 2
        %v643 = vxor.u32 %v633, 2147483648
        %v644 = vsel %vm642, %v643, %v634
        %v645 = vsel %vm638, %v641, %v644
        %v646 = vsel %vm635, nan, %v645
        %v647 = vand.u32 2147483647, %v371
        %vm648 = vcmp.le.f32.partialorder %v647, 0.7853982
        %vm649 = vcmp.lt.s32.totalorder %v371, 0
        %v650 = vand.u32 %v371, 2139095040
        %v651 = vshrl.u32 %v650, 23
        %v652 = vsub.s32 %v651, 127
        %v653 = vand.u32 2147483647, %v371
        %v654 = vand.u32 %v653, 8388607
        %v655 = vor.u32 %v654, 8388608
        %v656 = vsub.s32 0, %v655
        %v657 = vadd.s32 %v652, 1
        %vm658 = vcmp.gt.s32.totalorder %v657, 0
        %v659 = vsel %vm658, %v657, 0
        %v660 = vshrl.u32 %v659, 5
        %v661 = vand.u32 %v659, 31
        %v662 = vsub.s32 32, %v661
        %v663 = vshrl.u32 683565275, %v662
        %v664 = vshll.u32 683565275, %v661
        %v665 = vshrl.u32 2475754826, %v662
        %v666 = vor.u32 %v664, %v665
        %v667 = vshll.u32 2475754826, %v661
        %v668 = vshrl.u32 2131351028, %v662
        %v669 = vor.u32 %v667, %v668
        %v670 = vshll.u32 2131351028, %v661
        %v671 = vshrl.u32 2102212464, %v662
        %v672 = vor.u32 %v670, %v671
        %v673 = vshll.u32 2102212464, %v661
        %v674 = vshrl.u32 920167782, %v662
        %v675 = vor.u32 %v673, %v674
        %v676 = vshll.u32 920167782, %v661
        %v677 = vshrl.u32 1326507024, %v662
        %v678 = vor.u32 %v676, %v677
        %vm679 = vcmp.lt.s32.totalorder %v660, 1
        %vm680 = vcmp.lt.s32.totalorder %v660, 2
        %vm681 = vcmp.lt.s32.totalorder %v660, 3
        %vm682 = vcmp.lt.s32.totalorder %v660, 4
        %v683 = vsel %vm679, %v663, %v666
        %v684 = vsel %vm682, %v672, 2102212464
        %v685 = vsel %vm681, %v669, %v684
        %v686 = vsel %vm680, %v683, %v685
        %v687 = vsel %vm679, %v666, %v669
        %v688 = vsel %vm682, %v675, 920167782
        %v689 = vsel %vm681, %v672, %v688
        %v690 = vsel %vm680, %v687, %v689
        %v691 = vsel %vm679, %v669, %v672
        %v692 = vsel %vm682, %v678, 1326507024
        %v693 = vsel %vm681, %v675, %v692
        %v694 = vsel %vm680, %v691, %v693
        %v695 = vshll.u32 %v655, 8
        %v696 = vmul.u32.u64.compose %v695, %v694
        %v697 = vextract.low.u32 %v696
        %v698 = vextract.high.u32 %v696
        %v699 = vmul.u32.u64.compose %v695, %v690
        %v700 = vextract.low.u32 %v699
        %v701 = vextract.high.u32 %v699
        %v702 = vmul.u32 %v695, %v686
        %v703 = vadd.s32 %v698, %v700
        %vm704 = vc.u32 %v698, %v700
        %v705 = vadd.s32 %v701, 1
        %v706 = vsel %vm704, %v705, %v701
        %v707 = vadd.s32 %v702, %v706
        %v708 = vadd.s32 %v707, 536870912
        %v709 = vshrl.u32 %v708, 30
        %v710 = vshll.u32 %v709, 30
        %v711 = vsub.s32 %v707, %v710
        %vm712 = vcmp.lt.s32.totalorder %v711, 0
        %v713 = vsub.s32 0, %v711
        %v714 = vsel %vm712, %v713, %v711
        %v715 = vclz %v714
        %v716 = vsub.s32 %v715, 2
        %vm717 = vcmp.gt.s32.totalorder 0, %v716
        %v718 = vsel %vm717, 0, %v716
        %v719 = vsub.s32 32, %v718
        %v720 = vshll.u32 %v711, %v718
        %v721 = vshrl.u32 %v703, %v719
        %v722 = vor.u32 %v720, %v721
        %v723 = vsub.s32 4294967266, %v718
        %v724 = vadd.s32 %v723, 127
        %v725 = vshll.u32 %v724, 23
        %v726 = vor.u32 4788187, %v725
        %v727 = vand.u32 2147483647, %v726
        %v729 = vcvt.s32.f32 %v722
        %v730 = vmul.f32 %v729, %v727
        %v731 = vxor.u32 %v730, 2147483648
        %v732 = vsel %vm649, %v731, %v730
        %v733 = vsub.s32 4, %v709
        %v734 = vsel %vm649, %v733, %v709
        %v735 = vsel %vm648, %v371, %v732
        %v736 = vsel %vm648, 0, %v734
        %v737 = vcosq.f32.pop %v735
        %v738 = vsinq.f32.pop %v735
        %vm739 = vweird.f32 %v371
        %v740 = vadd.s32 %v736, 3
        %v741 = vand.u32 %v740, 3
        %vm742 = vcmp.lt.s32.totalorder %v741, 2
        %vm743 = vcmp.eq.s32.totalorder %v741, 0
        %v744 = vxor.u32 %v738, 2147483648
        %v745 = vsel %vm743, %v737, %v744
        %vm746 = vcmp.eq.s32.totalorder %v741, 2
        %v747 = vxor.u32 %v737, 2147483648
        %v748 = vsel %vm746, %v747, %v738
        %v749 = vsel %vm742, %v745, %v748
        %v750 = vsel %vm739, nan, %v749
        %v751 = vand.u32 2147483647, %v376
        %vm752 = vcmp.le.f32.partialorder %v751, 0.7853982
        %vm753 = vcmp.lt.s32.totalorder %v376, 0
        %v754 = vand.u32 %v376, 2139095040
        %v755 = vshrl.u32 %v754, 23
        %v756 = vsub.s32 %v755, 127
        %v757 = vand.u32 2147483647, %v376
        %v758 = vand.u32 %v757, 8388607
        %v759 = vor.u32 %v758, 8388608
        %v760 = vsub.s32 0, %v759
        %v761 = vadd.s32 %v756, 1
        %vm762 = vcmp.gt.s32.totalorder %v761, 0
        %v763 = vsel %vm762, %v761, 0
        %v764 = vshrl.u32 %v763, 5
        %v765 = vand.u32 %v763, 31
        %v766 = vsub.s32 32, %v765
        %v767 = vshrl.u32 683565275, %v766
        %v768 = vshll.u32 683565275, %v765
        %v769 = vshrl.u32 2475754826, %v766
        %v770 = vor.u32 %v768, %v769
        %v771 = vshll.u32 2475754826, %v765
        %v772 = vshrl.u32 2131351028, %v766
        %v773 = vor.u32 %v771, %v772
        %v774 = vshll.u32 2131351028, %v765
        %v775 = vshrl.u32 2102212464, %v766
        %v776 = vor.u32 %v774, %v775
        %v777 = vshll.u32 2102212464, %v765
        %v778 = vshrl.u32 920167782, %v766
        %v779 = vor.u32 %v777, %v778
        %v780 = vshll.u32 920167782, %v765
        %v781 = vshrl.u32 1326507024, %v766
        %v782 = vor.u32 %v780, %v781
        %vm783 = vcmp.lt.s32.totalorder %v764, 1
        %vm784 = vcmp.lt.s32.totalorder %v764, 2
        %vm785 = vcmp.lt.s32.totalorder %v764, 3
        %vm786 = vcmp.lt.s32.totalorder %v764, 4
        %v787 = vsel %vm783, %v767, %v770
        %v788 = vsel %vm786, %v776, 2102212464
        %v789 = vsel %vm785, %v773, %v788
        %v790 = vsel %vm784, %v787, %v789
        %v791 = vsel %vm783, %v770, %v773
        %v792 = vsel %vm786, %v779, 920167782
        %v793 = vsel %vm785, %v776, %v792
        %v794 = vsel %vm784, %v791, %v793
        %v795 = vsel %vm783, %v773, %v776
        %v796 = vsel %vm786, %v782, 1326507024
        %v797 = vsel %vm785, %v779, %v796
        %v798 = vsel %vm784, %v795, %v797
        %v799 = vshll.u32 %v759, 8
        %v800 = vmul.u32.u64.compose %v799, %v798
        %v801 = vextract.low.u32 %v800
        %v802 = vextract.high.u32 %v800
        %v803 = vmul.u32.u64.compose %v799, %v794
        %v804 = vextract.low.u32 %v803
        %v805 = vextract.high.u32 %v803
        %v806 = vmul.u32 %v799, %v790
        %v807 = vadd.s32 %v802, %v804
        %vm808 = vc.u32 %v802, %v804
        %v809 = vadd.s32 %v805, 1
        %v810 = vsel %vm808, %v809, %v805
        %v811 = vadd.s32 %v806, %v810
        %v812 = vadd.s32 %v811, 536870912
        %v813 = vshrl.u32 %v812, 30
        %v814 = vshll.u32 %v813, 30
        %v815 = vsub.s32 %v811, %v814
        %vm816 = vcmp.lt.s32.totalorder %v815, 0
        %v817 = vsub.s32 0, %v815
        %v818 = vsel %vm816, %v817, %v815
        %v819 = vclz %v818
        %v820 = vsub.s32 %v819, 2
        %vm821 = vcmp.gt.s32.totalorder 0, %v820
        %v822 = vsel %vm821, 0, %v820
        %v823 = vsub.s32 32, %v822
        %v824 = vshll.u32 %v815, %v822
        %v825 = vshrl.u32 %v807, %v823
        %v826 = vor.u32 %v824, %v825
        %v827 = vsub.s32 4294967266, %v822
        %v828 = vadd.s32 %v827, 127
        %v829 = vshll.u32 %v828, 23
        %v830 = vor.u32 4788187, %v829
        %v831 = vand.u32 2147483647, %v830
        %v833 = vcvt.s32.f32 %v826
        %v834 = vmul.f32 %v833, %v831
        %v835 = vxor.u32 %v834, 2147483648
        %v836 = vsel %vm753, %v835, %v834
        %v837 = vsub.s32 4, %v813
        %v838 = vsel %vm753, %v837, %v813
        %v839 = vsel %vm752, %v376, %v836
        %v840 = vsel %vm752, 0, %v838
        %v841 = vcosq.f32.pop %v839
        %v842 = vsinq.f32.pop %v839
        %vm843 = vweird.f32 %v376
        %v844 = vadd.s32 %v840, 3
        %v845 = vand.u32 %v844, 3
        %vm846 = vcmp.lt.s32.totalorder %v845, 2
        %vm847 = vcmp.eq.s32.totalorder %v845, 0
        %v848 = vxor.u32 %v842, 2147483648
        %v849 = vsel %vm847, %v841, %v848
        %vm850 = vcmp.eq.s32.totalorder %v845, 2
        %v851 = vxor.u32 %v841, 2147483648
        %v852 = vsel %vm850, %v851, %v842
        %v853 = vsel %vm846, %v849, %v852
        %v854 = vsel %vm843, nan, %v853
        %v855 = vand.u32 2147483647, %v381
        %vm856 = vcmp.le.f32.partialorder %v855, 0.7853982
        %vm857 = vcmp.lt.s32.totalorder %v381, 0
        %v858 = vand.u32 %v381, 2139095040
        %v859 = vshrl.u32 %v858, 23
        %v860 = vsub.s32 %v859, 127
        %v861 = vand.u32 2147483647, %v381
        %v862 = vand.u32 %v861, 8388607
        %v863 = vor.u32 %v862, 8388608
        %v864 = vsub.s32 0, %v863
        %v865 = vadd.s32 %v860, 1
        %vm866 = vcmp.gt.s32.totalorder %v865, 0
        %v867 = vsel %vm866, %v865, 0
        %v868 = vshrl.u32 %v867, 5
        %v869 = vand.u32 %v867, 31
        %v870 = vsub.s32 32, %v869
        %v871 = vshrl.u32 683565275, %v870
        %v872 = vshll.u32 683565275, %v869
        %v873 = vshrl.u32 2475754826, %v870
        %v874 = vor.u32 %v872, %v873
        %v875 = vshll.u32 2475754826, %v869
        %v876 = vshrl.u32 2131351028, %v870
        %v877 = vor.u32 %v875, %v876
        %v878 = vshll.u32 2131351028, %v869
        %v879 = vshrl.u32 2102212464, %v870
        %v880 = vor.u32 %v878, %v879
        %v881 = vshll.u32 2102212464, %v869
        %v882 = vshrl.u32 920167782, %v870
        %v883 = vor.u32 %v881, %v882
        %v884 = vshll.u32 920167782, %v869
        %v885 = vshrl.u32 1326507024, %v870
        %v886 = vor.u32 %v884, %v885
        %vm887 = vcmp.lt.s32.totalorder %v868, 1
        %vm888 = vcmp.lt.s32.totalorder %v868, 2
        %vm889 = vcmp.lt.s32.totalorder %v868, 3
        %vm890 = vcmp.lt.s32.totalorder %v868, 4
        %v891 = vsel %vm887, %v871, %v874
        %v892 = vsel %vm890, %v880, 2102212464
        %v893 = vsel %vm889, %v877, %v892
        %v894 = vsel %vm888, %v891, %v893
        %v895 = vsel %vm887, %v874, %v877
        %v896 = vsel %vm890, %v883, 920167782
        %v897 = vsel %vm889, %v880, %v896
        %v898 = vsel %vm888, %v895, %v897
        %v899 = vsel %vm887, %v877, %v880
        %v900 = vsel %vm890, %v886, 1326507024
        %v901 = vsel %vm889, %v883, %v900
        %v902 = vsel %vm888, %v899, %v901
        %v903 = vshll.u32 %v863, 8
        %v904 = vmul.u32.u64.compose %v903, %v902
        %v905 = vextract.low.u32 %v904
        %v906 = vextract.high.u32 %v904
        %v907 = vmul.u32.u64.compose %v903, %v898
        %v908 = vextract.low.u32 %v907
        %v909 = vextract.high.u32 %v907
        %v910 = vmul.u32 %v903, %v894
        %v911 = vadd.s32 %v906, %v908
        %vm912 = vc.u32 %v906, %v908
        %v913 = vadd.s32 %v909, 1
        %v914 = vsel %vm912, %v913, %v909
        %v915 = vadd.s32 %v910, %v914
        %v916 = vadd.s32 %v915, 536870912
        %v917 = vshrl.u32 %v916, 30
        %v918 = vshll.u32 %v917, 30
        %v919 = vsub.s32 %v915, %v918
        %vm920 = vcmp.lt.s32.totalorder %v919, 0
        %v921 = vsub.s32 0, %v919
        %v922 = vsel %vm920, %v921, %v919
        %v923 = vclz %v922
        %v924 = vsub.s32 %v923, 2
        %vm925 = vcmp.gt.s32.totalorder 0, %v924
        %v926 = vsel %vm925, 0, %v924
        %v927 = vsub.s32 32, %v926
        %v928 = vshll.u32 %v919, %v926
        %v929 = vshrl.u32 %v911, %v927
        %v930 = vor.u32 %v928, %v929
        %v931 = vsub.s32 4294967266, %v926
        %v932 = vadd.s32 %v931, 127
        %v933 = vshll.u32 %v932, 23
        %v934 = vor.u32 4788187, %v933
        %v935 = vand.u32 2147483647, %v934
        %v937 = vcvt.s32.f32 %v930
        %v938 = vmul.f32 %v937, %v935
        %v939 = vxor.u32 %v938, 2147483648
        %v940 = vsel %vm857, %v939, %v938
        %v941 = vsub.s32 4, %v917
        %v942 = vsel %vm857, %v941, %v917
        %v943 = vsel %vm856, %v381, %v940
        %v944 = vsel %vm856, 0, %v942
        %v945 = vcosq.f32.pop %v943
        %v946 = vsinq.f32.pop %v943
        %vm947 = vweird.f32 %v381
        %v948 = vadd.s32 %v944, 3
        %v949 = vand.u32 %v948, 3
        %vm950 = vcmp.lt.s32.totalorder %v949, 2
        %vm951 = vcmp.eq.s32.totalorder %v949, 0
        %v952 = vxor.u32 %v946, 2147483648
        %v953 = vsel %vm951, %v945, %v952
        %vm954 = vcmp.eq.s32.totalorder %v949, 2
        %v955 = vxor.u32 %v945, 2147483648
        %v956 = vsel %vm954, %v955, %v946
        %v957 = vsel %vm950, %v953, %v956
        %v958 = vsel %vm947, nan, %v957
        %v959 = vand.u32 2147483647, %v386
        %vm960 = vcmp.le.f32.partialorder %v959, 0.7853982
        %vm961 = vcmp.lt.s32.totalorder %v386, 0
        %v962 = vand.u32 %v386, 2139095040
        %v963 = vshrl.u32 %v962, 23
        %v964 = vsub.s32 %v963, 127
        %v965 = vand.u32 2147483647, %v386
        %v966 = vand.u32 %v965, 8388607
        %v967 = vor.u32 %v966, 8388608
        %v968 = vsub.s32 0, %v967
        %v969 = vadd.s32 %v964, 1
        %vm970 = vcmp.gt.s32.totalorder %v969, 0
        %v971 = vsel %vm970, %v969, 0
        %v972 = vshrl.u32 %v971, 5
        %v973 = vand.u32 %v971, 31
        %v974 = vsub.s32 32, %v973
        %v975 = vshrl.u32 683565275, %v974
        %v976 = vshll.u32 683565275, %v973
        %v977 = vshrl.u32 2475754826, %v974
        %v978 = vor.u32 %v976, %v977
        %v979 = vshll.u32 2475754826, %v973
        %v980 = vshrl.u32 2131351028, %v974
        %v981 = vor.u32 %v979, %v980
        %v982 = vshll.u32 2131351028, %v973
        %v983 = vshrl.u32 2102212464, %v974
        %v984 = vor.u32 %v982, %v983
        %v985 = vshll.u32 2102212464, %v973
        %v986 = vshrl.u32 920167782, %v974
        %v987 = vor.u32 %v985, %v986
        %v988 = vshll.u32 920167782, %v973
        %v989 = vshrl.u32 1326507024, %v974
        %v990 = vor.u32 %v988, %v989
        %vm991 = vcmp.lt.s32.totalorder %v972, 1
        %vm992 = vcmp.lt.s32.totalorder %v972, 2
        %vm993 = vcmp.lt.s32.totalorder %v972, 3
        %vm994 = vcmp.lt.s32.totalorder %v972, 4
        %v995 = vsel %vm991, %v975, %v978
        %v996 = vsel %vm994, %v984, 2102212464
        %v997 = vsel %vm993, %v981, %v996
        %v998 = vsel %vm992, %v995, %v997
        %v999 = vsel %vm991, %v978, %v981
        %v1000 = vsel %vm994, %v987, 920167782
        %v1001 = vsel %vm993, %v984, %v1000
        %v1002 = vsel %vm992, %v999, %v1001
        %v1003 = vsel %vm991, %v981, %v984
        %v1004 = vsel %vm994, %v990, 1326507024
        %v1005 = vsel %vm993, %v987, %v1004
        %v1006 = vsel %vm992, %v1003, %v1005
        %v1007 = vshll.u32 %v967, 8
        %v1008 = vmul.u32.u64.compose %v1007, %v1006
        %v1009 = vextract.low.u32 %v1008
        %v1010 = vextract.high.u32 %v1008
        %v1011 = vmul.u32.u64.compose %v1007, %v1002
        %v1012 = vextract.low.u32 %v1011
        %v1013 = vextract.high.u32 %v1011
        %v1014 = vmul.u32 %v1007, %v998
        %v1015 = vadd.s32 %v1010, %v1012
        %vm1016 = vc.u32 %v1010, %v1012
        %v1017 = vadd.s32 %v1013, 1
        %v1018 = vsel %vm1016, %v1017, %v1013
        %v1019 = vadd.s32 %v1014, %v1018
        %v1020 = vadd.s32 %v1019, 536870912
        %v1021 = vshrl.u32 %v1020, 30
        %v1022 = vshll.u32 %v1021, 30
        %v1023 = vsub.s32 %v1019, %v1022
        %vm1024 = vcmp.lt.s32.totalorder %v1023, 0
        %v1025 = vsub.s32 0, %v1023
        %v1026 = vsel %vm1024, %v1025, %v1023
        %v1027 = vclz %v1026
        %v1028 = vsub.s32 %v1027, 2
        %vm1029 = vcmp.gt.s32.totalorder 0, %v1028
        %v1030 = vsel %vm1029, 0, %v1028
        %v1031 = vsub.s32 32, %v1030
        %v1032 = vshll.u32 %v1023, %v1030
        %v1033 = vshrl.u32 %v1015, %v1031
        %v1034 = vor.u32 %v1032, %v1033
        %v1035 = vsub.s32 4294967266, %v1030
        %v1036 = vadd.s32 %v1035, 127
        %v1037 = vshll.u32 %v1036, 23
        %v1038 = vor.u32 4788187, %v1037
        %v1039 = vand.u32 2147483647, %v1038
        %v1041 = vcvt.s32.f32 %v1034
        %v1042 = vmul.f32 %v1041, %v1039
        %v1043 = vxor.u32 %v1042, 2147483648
        %v1044 = vsel %vm961, %v1043, %v1042
        %v1045 = vsub.s32 4, %v1021
        %v1046 = vsel %vm961, %v1045, %v1021
        %v1047 = vsel %vm960, %v386, %v1044
        %v1048 = vsel %vm960, 0, %v1046
        %v1049 = vcosq.f32.pop %v1047
        %v1050 = vsinq.f32.pop %v1047
        %vm1051 = vweird.f32 %v386
        %v1052 = vadd.s32 %v1048, 3
        %v1053 = vand.u32 %v1052, 3
        %vm1054 = vcmp.lt.s32.totalorder %v1053, 2
        %vm1055 = vcmp.eq.s32.totalorder %v1053, 0
        %v1056 = vxor.u32 %v1050, 2147483648
        %v1057 = vsel %vm1055, %v1049, %v1056
        %vm1058 = vcmp.eq.s32.totalorder %v1053, 2
        %v1059 = vxor.u32 %v1049, 2147483648
        %v1060 = vsel %vm1058, %v1059, %v1050
        %v1061 = vsel %vm1054, %v1057, %v1060
        %v1062 = vsel %vm1051, nan, %v1061
        %v1063 = vand.u32 2147483647, %v391
        %vm1064 = vcmp.le.f32.partialorder %v1063, 0.7853982
        %vm1065 = vcmp.lt.s32.totalorder %v391, 0
        %v1066 = vand.u32 %v391, 2139095040
        %v1067 = vshrl.u32 %v1066, 23
        %v1068 = vsub.s32 %v1067, 127
        %v1069 = vand.u32 2147483647, %v391
        %v1070 = vand.u32 %v1069, 8388607
        %v1071 = vor.u32 %v1070, 8388608
        %v1072 = vsub.s32 0, %v1071
        %v1073 = vadd.s32 %v1068, 1
        %vm1074 = vcmp.gt.s32.totalorder %v1073, 0
        %v1075 = vsel %vm1074, %v1073, 0
        %v1076 = vshrl.u32 %v1075, 5
        %v1077 = vand.u32 %v1075, 31
        %v1078 = vsub.s32 32, %v1077
        %v1079 = vshrl.u32 683565275, %v1078
        %v1080 = vshll.u32 683565275, %v1077
        %v1081 = vshrl.u32 2475754826, %v1078
        %v1082 = vor.u32 %v1080, %v1081
        %v1083 = vshll.u32 2475754826, %v1077
        %v1084 = vshrl.u32 2131351028, %v1078
        %v1085 = vor.u32 %v1083, %v1084
        %v1086 = vshll.u32 2131351028, %v1077
        %v1087 = vshrl.u32 2102212464, %v1078
        %v1088 = vor.u32 %v1086, %v1087
        %v1089 = vshll.u32 2102212464, %v1077
        %v1090 = vshrl.u32 920167782, %v1078
        %v1091 = vor.u32 %v1089, %v1090
        %v1092 = vshll.u32 920167782, %v1077
        %v1093 = vshrl.u32 1326507024, %v1078
        %v1094 = vor.u32 %v1092, %v1093
        %vm1095 = vcmp.lt.s32.totalorder %v1076, 1
        %vm1096 = vcmp.lt.s32.totalorder %v1076, 2
        %vm1097 = vcmp.lt.s32.totalorder %v1076, 3
        %vm1098 = vcmp.lt.s32.totalorder %v1076, 4
        %v1099 = vsel %vm1095, %v1079, %v1082
        %v1100 = vsel %vm1098, %v1088, 2102212464
        %v1101 = vsel %vm1097, %v1085, %v1100
        %v1102 = vsel %vm1096, %v1099, %v1101
        %v1103 = vsel %vm1095, %v1082, %v1085
        %v1104 = vsel %vm1098, %v1091, 920167782
        %v1105 = vsel %vm1097, %v1088, %v1104
        %v1106 = vsel %vm1096, %v1103, %v1105
        %v1107 = vsel %vm1095, %v1085, %v1088
        %v1108 = vsel %vm1098, %v1094, 1326507024
        %v1109 = vsel %vm1097, %v1091, %v1108
        %v1110 = vsel %vm1096, %v1107, %v1109
        %v1111 = vshll.u32 %v1071, 8
        %v1112 = vmul.u32.u64.compose %v1111, %v1110
        %v1113 = vextract.low.u32 %v1112
        %v1114 = vextract.high.u32 %v1112
        %v1115 = vmul.u32.u64.compose %v1111, %v1106
        %v1116 = vextract.low.u32 %v1115
        %v1117 = vextract.high.u32 %v1115
        %v1118 = vmul.u32 %v1111, %v1102
        %v1119 = vadd.s32 %v1114, %v1116
        %vm1120 = vc.u32 %v1114, %v1116
        %v1121 = vadd.s32 %v1117, 1
        %v1122 = vsel %vm1120, %v1121, %v1117
        %v1123 = vadd.s32 %v1118, %v1122
        %v1124 = vadd.s32 %v1123, 536870912
        %v1125 = vshrl.u32 %v1124, 30
        %v1126 = vshll.u32 %v1125, 30
        %v1127 = vsub.s32 %v1123, %v1126
        %vm1128 = vcmp.lt.s32.totalorder %v1127, 0
        %v1129 = vsub.s32 0, %v1127
        %v1130 = vsel %vm1128, %v1129, %v1127
        %v1131 = vclz %v1130
        %v1132 = vsub.s32 %v1131, 2
        %vm1133 = vcmp.gt.s32.totalorder 0, %v1132
        %v1134 = vsel %vm1133, 0, %v1132
        %v1135 = vsub.s32 32, %v1134
        %v1136 = vshll.u32 %v1127, %v1134
        %v1137 = vshrl.u32 %v1119, %v1135
        %v1138 = vor.u32 %v1136, %v1137
        %v1139 = vsub.s32 4294967266, %v1134
        %v1140 = vadd.s32 %v1139, 127
        %v1141 = vshll.u32 %v1140, 23
        %v1142 = vor.u32 4788187, %v1141
        %v1143 = vand.u32 2147483647, %v1142
        %v1145 = vcvt.s32.f32 %v1138
        %v1146 = vmul.f32 %v1145, %v1143
        %v1147 = vxor.u32 %v1146, 2147483648
        %v1148 = vsel %vm1065, %v1147, %v1146
        %v1149 = vsub.s32 4, %v1125
        %v1150 = vsel %vm1065, %v1149, %v1125
        %v1151 = vsel %vm1064, %v391, %v1148
        %v1152 = vsel %vm1064, 0, %v1150
        %v1153 = vcosq.f32.pop %v1151
        %v1154 = vsinq.f32.pop %v1151
        %vm1155 = vweird.f32 %v391
        %v1156 = vadd.s32 %v1152, 3
        %v1157 = vand.u32 %v1156, 3
        %vm1158 = vcmp.lt.s32.totalorder %v1157, 2
        %vm1159 = vcmp.eq.s32.totalorder %v1157, 0
        %v1160 = vxor.u32 %v1154, 2147483648
        %v1161 = vsel %vm1159, %v1153, %v1160
        %vm1162 = vcmp.eq.s32.totalorder %v1157, 2
        %v1163 = vxor.u32 %v1153, 2147483648
        %v1164 = vsel %vm1162, %v1163, %v1154
        %v1165 = vsel %vm1158, %v1161, %v1164
        %v1166 = vsel %vm1155, nan, %v1165
        %v1167 = vand.u32 2147483647, %v396
        %vm1168 = vcmp.le.f32.partialorder %v1167, 0.7853982
        %vm1169 = vcmp.lt.s32.totalorder %v396, 0
        %v1170 = vand.u32 %v396, 2139095040
        %v1171 = vshrl.u32 %v1170, 23
        %v1172 = vsub.s32 %v1171, 127
        %v1173 = vand.u32 2147483647, %v396
        %v1174 = vand.u32 %v1173, 8388607
        %v1175 = vor.u32 %v1174, 8388608
        %v1176 = vsub.s32 0, %v1175
        %v1177 = vadd.s32 %v1172, 1
        %vm1178 = vcmp.gt.s32.totalorder %v1177, 0
        %v1179 = vsel %vm1178, %v1177, 0
        %v1180 = vshrl.u32 %v1179, 5
        %v1181 = vand.u32 %v1179, 31
        %v1182 = vsub.s32 32, %v1181
        %v1183 = vshrl.u32 683565275, %v1182
        %v1184 = vshll.u32 683565275, %v1181
        %v1185 = vshrl.u32 2475754826, %v1182
        %v1186 = vor.u32 %v1184, %v1185
        %v1187 = vshll.u32 2475754826, %v1181
        %v1188 = vshrl.u32 2131351028, %v1182
        %v1189 = vor.u32 %v1187, %v1188
        %v1190 = vshll.u32 2131351028, %v1181
        %v1191 = vshrl.u32 2102212464, %v1182
        %v1192 = vor.u32 %v1190, %v1191
        %v1193 = vshll.u32 2102212464, %v1181
        %v1194 = vshrl.u32 920167782, %v1182
        %v1195 = vor.u32 %v1193, %v1194
        %v1196 = vshll.u32 920167782, %v1181
        %v1197 = vshrl.u32 1326507024, %v1182
        %v1198 = vor.u32 %v1196, %v1197
        %vm1199 = vcmp.lt.s32.totalorder %v1180, 1
        %vm1200 = vcmp.lt.s32.totalorder %v1180, 2
        %vm1201 = vcmp.lt.s32.totalorder %v1180, 3
        %vm1202 = vcmp.lt.s32.totalorder %v1180, 4
        %v1203 = vsel %vm1199, %v1183, %v1186
        %v1204 = vsel %vm1202, %v1192, 2102212464
        %v1205 = vsel %vm1201, %v1189, %v1204
        %v1206 = vsel %vm1200, %v1203, %v1205
        %v1207 = vsel %vm1199, %v1186, %v1189
        %v1208 = vsel %vm1202, %v1195, 920167782
        %v1209 = vsel %vm1201, %v1192, %v1208
        %v1210 = vsel %vm1200, %v1207, %v1209
        %v1211 = vsel %vm1199, %v1189, %v1192
        %v1212 = vsel %vm1202, %v1198, 1326507024
        %v1213 = vsel %vm1201, %v1195, %v1212
        %v1214 = vsel %vm1200, %v1211, %v1213
        %v1215 = vshll.u32 %v1175, 8
        %v1216 = vmul.u32.u64.compose %v1215, %v1214
        %v1217 = vextract.low.u32 %v1216
        %v1218 = vextract.high.u32 %v1216
        %v1219 = vmul.u32.u64.compose %v1215, %v1210
        %v1220 = vextract.low.u32 %v1219
        %v1221 = vextract.high.u32 %v1219
        %v1222 = vmul.u32 %v1215, %v1206
        %v1223 = vadd.s32 %v1218, %v1220
        %vm1224 = vc.u32 %v1218, %v1220
        %v1225 = vadd.s32 %v1221, 1
        %v1226 = vsel %vm1224, %v1225, %v1221
        %v1227 = vadd.s32 %v1222, %v1226
        %v1228 = vadd.s32 %v1227, 536870912
        %v1229 = vshrl.u32 %v1228, 30
        %v1230 = vshll.u32 %v1229, 30
        %v1231 = vsub.s32 %v1227, %v1230
        %vm1232 = vcmp.lt.s32.totalorder %v1231, 0
        %v1233 = vsub.s32 0, %v1231
        %v1234 = vsel %vm1232, %v1233, %v1231
        %v1235 = vclz %v1234
        %v1236 = vsub.s32 %v1235, 2
        %vm1237 = vcmp.gt.s32.totalorder 0, %v1236
        %v1238 = vsel %vm1237, 0, %v1236
        %v1239 = vsub.s32 32, %v1238
        %v1240 = vshll.u32 %v1231, %v1238
        %v1241 = vshrl.u32 %v1223, %v1239
        %v1242 = vor.u32 %v1240, %v1241
        %v1243 = vsub.s32 4294967266, %v1238
        %v1244 = vadd.s32 %v1243, 127
        %v1245 = vshll.u32 %v1244, 23
        %v1246 = vor.u32 4788187, %v1245
        %v1247 = vand.u32 2147483647, %v1246
        %v1249 = vcvt.s32.f32 %v1242
        %v1250 = vmul.f32 %v1249, %v1247
        %v1251 = vxor.u32 %v1250, 2147483648
        %v1252 = vsel %vm1169, %v1251, %v1250
        %v1253 = vsub.s32 4, %v1229
        %v1254 = vsel %vm1169, %v1253, %v1229
        %v1255 = vsel %vm1168, %v396, %v1252
        %v1256 = vsel %vm1168, 0, %v1254
        %v1257 = vcosq.f32.pop %v1255
        %v1258 = vsinq.f32.pop %v1255
        %vm1259 = vweird.f32 %v396
        %v1260 = vadd.s32 %v1256, 3
        %v1261 = vand.u32 %v1260, 3
        %vm1262 = vcmp.lt.s32.totalorder %v1261, 2
        %vm1263 = vcmp.eq.s32.totalorder %v1261, 0
        %v1264 = vxor.u32 %v1258, 2147483648
        %v1265 = vsel %vm1263, %v1257, %v1264
        %vm1266 = vcmp.eq.s32.totalorder %v1261, 2
        %v1267 = vxor.u32 %v1257, 2147483648
        %v1268 = vsel %vm1266, %v1267, %v1258
        %v1269 = vsel %vm1262, %v1265, %v1268
        %v1270 = vsel %vm1259, nan, %v1269
        %v1271 = vand.u32 2147483647, %v401
        %vm1272 = vcmp.le.f32.partialorder %v1271, 0.7853982
        %vm1273 = vcmp.lt.s32.totalorder %v401, 0
        %v1274 = vand.u32 %v401, 2139095040
        %v1275 = vshrl.u32 %v1274, 23
        %v1276 = vsub.s32 %v1275, 127
        %v1277 = vand.u32 2147483647, %v401
        %v1278 = vand.u32 %v1277, 8388607
        %v1279 = vor.u32 %v1278, 8388608
        %v1280 = vsub.s32 0, %v1279
        %v1281 = vadd.s32 %v1276, 1
        %vm1282 = vcmp.gt.s32.totalorder %v1281, 0
        %v1283 = vsel %vm1282, %v1281, 0
        %v1284 = vshrl.u32 %v1283, 5
        %v1285 = vand.u32 %v1283, 31
        %v1286 = vsub.s32 32, %v1285
        %v1287 = vshrl.u32 683565275, %v1286
        %v1288 = vshll.u32 683565275, %v1285
        %v1289 = vshrl.u32 2475754826, %v1286
        %v1290 = vor.u32 %v1288, %v1289
        %v1291 = vshll.u32 2475754826, %v1285
        %v1292 = vshrl.u32 2131351028, %v1286
        %v1293 = vor.u32 %v1291, %v1292
        %v1294 = vshll.u32 2131351028, %v1285
        %v1295 = vshrl.u32 2102212464, %v1286
        %v1296 = vor.u32 %v1294, %v1295
        %v1297 = vshll.u32 2102212464, %v1285
        %v1298 = vshrl.u32 920167782, %v1286
        %v1299 = vor.u32 %v1297, %v1298
        %v1300 = vshll.u32 920167782, %v1285
        %v1301 = vshrl.u32 1326507024, %v1286
        %v1302 = vor.u32 %v1300, %v1301
        %vm1303 = vcmp.lt.s32.totalorder %v1284, 1
        %vm1304 = vcmp.lt.s32.totalorder %v1284, 2
        %vm1305 = vcmp.lt.s32.totalorder %v1284, 3
        %vm1306 = vcmp.lt.s32.totalorder %v1284, 4
        %v1307 = vsel %vm1303, %v1287, %v1290
        %v1308 = vsel %vm1306, %v1296, 2102212464
        %v1309 = vsel %vm1305, %v1293, %v1308
        %v1310 = vsel %vm1304, %v1307, %v1309
        %v1311 = vsel %vm1303, %v1290, %v1293
        %v1312 = vsel %vm1306, %v1299, 920167782
        %v1313 = vsel %vm1305, %v1296, %v1312
        %v1314 = vsel %vm1304, %v1311, %v1313
        %v1315 = vsel %vm1303, %v1293, %v1296
        %v1316 = vsel %vm1306, %v1302, 1326507024
        %v1317 = vsel %vm1305, %v1299, %v1316
        %v1318 = vsel %vm1304, %v1315, %v1317
        %v1319 = vshll.u32 %v1279, 8
        %v1320 = vmul.u32.u64.compose %v1319, %v1318
        %v1321 = vextract.low.u32 %v1320
        %v1322 = vextract.high.u32 %v1320
        %v1323 = vmul.u32.u64.compose %v1319, %v1314
        %v1324 = vextract.low.u32 %v1323
        %v1325 = vextract.high.u32 %v1323
        %v1326 = vmul.u32 %v1319, %v1310
        %v1327 = vadd.s32 %v1322, %v1324
        %vm1328 = vc.u32 %v1322, %v1324
        %v1329 = vadd.s32 %v1325, 1
        %v1330 = vsel %vm1328, %v1329, %v1325
        %v1331 = vadd.s32 %v1326, %v1330
        %v1332 = vadd.s32 %v1331, 536870912
        %v1333 = vshrl.u32 %v1332, 30
        %v1334 = vshll.u32 %v1333, 30
        %v1335 = vsub.s32 %v1331, %v1334
        %vm1336 = vcmp.lt.s32.totalorder %v1335, 0
        %v1337 = vsub.s32 0, %v1335
        %v1338 = vsel %vm1336, %v1337, %v1335
        %v1339 = vclz %v1338
        %v1340 = vsub.s32 %v1339, 2
        %vm1341 = vcmp.gt.s32.totalorder 0, %v1340
        %v1342 = vsel %vm1341, 0, %v1340
        %v1343 = vsub.s32 32, %v1342
        %v1344 = vshll.u32 %v1335, %v1342
        %v1345 = vshrl.u32 %v1327, %v1343
        %v1346 = vor.u32 %v1344, %v1345
        %v1347 = vsub.s32 4294967266, %v1342
        %v1348 = vadd.s32 %v1347, 127
        %v1349 = vshll.u32 %v1348, 23
        %v1350 = vor.u32 4788187, %v1349
        %v1351 = vand.u32 2147483647, %v1350
        %v1353 = vcvt.s32.f32 %v1346
        %v1354 = vmul.f32 %v1353, %v1351
        %v1355 = vxor.u32 %v1354, 2147483648
        %v1356 = vsel %vm1273, %v1355, %v1354
        %v1357 = vsub.s32 4, %v1333
        %v1358 = vsel %vm1273, %v1357, %v1333
        %v1359 = vsel %vm1272, %v401, %v1356
        %v1360 = vsel %vm1272, 0, %v1358
        %v1361 = vcosq.f32.pop %v1359
        %v1362 = vsinq.f32.pop %v1359
        %vm1363 = vweird.f32 %v401
        %v1364 = vadd.s32 %v1360, 3
        %v1365 = vand.u32 %v1364, 3
        %vm1366 = vcmp.lt.s32.totalorder %v1365, 2
        %vm1367 = vcmp.eq.s32.totalorder %v1365, 0
        %v1368 = vxor.u32 %v1362, 2147483648
        %v1369 = vsel %vm1367, %v1361, %v1368
        %vm1370 = vcmp.eq.s32.totalorder %v1365, 2
        %v1371 = vxor.u32 %v1361, 2147483648
        %v1372 = vsel %vm1370, %v1371, %v1362
        %v1373 = vsel %vm1366, %v1369, %v1372
        %v1374 = vsel %vm1363, nan, %v1373
        %v1375 = vand.u32 2147483647, %v406
        %vm1376 = vcmp.le.f32.partialorder %v1375, 0.7853982
        %vm1377 = vcmp.lt.s32.totalorder %v406, 0
        %v1378 = vand.u32 %v406, 2139095040
        %v1379 = vshrl.u32 %v1378, 23
        %v1380 = vsub.s32 %v1379, 127
        %v1381 = vand.u32 2147483647, %v406
        %v1382 = vand.u32 %v1381, 8388607
        %v1383 = vor.u32 %v1382, 8388608
        %v1384 = vsub.s32 0, %v1383
        %v1385 = vadd.s32 %v1380, 1
        %vm1386 = vcmp.gt.s32.totalorder %v1385, 0
        %v1387 = vsel %vm1386, %v1385, 0
        %v1388 = vshrl.u32 %v1387, 5
        %v1389 = vand.u32 %v1387, 31
        %v1390 = vsub.s32 32, %v1389
        %v1391 = vshrl.u32 683565275, %v1390
        %v1392 = vshll.u32 683565275, %v1389
        %v1393 = vshrl.u32 2475754826, %v1390
        %v1394 = vor.u32 %v1392, %v1393
        %v1395 = vshll.u32 2475754826, %v1389
        %v1396 = vshrl.u32 2131351028, %v1390
        %v1397 = vor.u32 %v1395, %v1396
        %v1398 = vshll.u32 2131351028, %v1389
        %v1399 = vshrl.u32 2102212464, %v1390
        %v1400 = vor.u32 %v1398, %v1399
        %v1401 = vshll.u32 2102212464, %v1389
        %v1402 = vshrl.u32 920167782, %v1390
        %v1403 = vor.u32 %v1401, %v1402
        %v1404 = vshll.u32 920167782, %v1389
        %v1405 = vshrl.u32 1326507024, %v1390
        %v1406 = vor.u32 %v1404, %v1405
        %vm1407 = vcmp.lt.s32.totalorder %v1388, 1
        %vm1408 = vcmp.lt.s32.totalorder %v1388, 2
        %vm1409 = vcmp.lt.s32.totalorder %v1388, 3
        %vm1410 = vcmp.lt.s32.totalorder %v1388, 4
        %v1411 = vsel %vm1407, %v1391, %v1394
        %v1412 = vsel %vm1410, %v1400, 2102212464
        %v1413 = vsel %vm1409, %v1397, %v1412
        %v1414 = vsel %vm1408, %v1411, %v1413
        %v1415 = vsel %vm1407, %v1394, %v1397
        %v1416 = vsel %vm1410, %v1403, 920167782
        %v1417 = vsel %vm1409, %v1400, %v1416
        %v1418 = vsel %vm1408, %v1415, %v1417
        %v1419 = vsel %vm1407, %v1397, %v1400
        %v1420 = vsel %vm1410, %v1406, 1326507024
        %v1421 = vsel %vm1409, %v1403, %v1420
        %v1422 = vsel %vm1408, %v1419, %v1421
        %v1423 = vshll.u32 %v1383, 8
        %v1424 = vmul.u32.u64.compose %v1423, %v1422
        %v1425 = vextract.low.u32 %v1424
        %v1426 = vextract.high.u32 %v1424
        %v1427 = vmul.u32.u64.compose %v1423, %v1418
        %v1428 = vextract.low.u32 %v1427
        %v1429 = vextract.high.u32 %v1427
        %v1430 = vmul.u32 %v1423, %v1414
        %v1431 = vadd.s32 %v1426, %v1428
        %vm1432 = vc.u32 %v1426, %v1428
        %v1433 = vadd.s32 %v1429, 1
        %v1434 = vsel %vm1432, %v1433, %v1429
        %v1435 = vadd.s32 %v1430, %v1434
        %v1436 = vadd.s32 %v1435, 536870912
        %v1437 = vshrl.u32 %v1436, 30
        %v1438 = vshll.u32 %v1437, 30
        %v1439 = vsub.s32 %v1435, %v1438
        %vm1440 = vcmp.lt.s32.totalorder %v1439, 0
        %v1441 = vsub.s32 0, %v1439
        %v1442 = vsel %vm1440, %v1441, %v1439
        %v1443 = vclz %v1442
        %v1444 = vsub.s32 %v1443, 2
        %vm1445 = vcmp.gt.s32.totalorder 0, %v1444
        %v1446 = vsel %vm1445, 0, %v1444
        %v1447 = vsub.s32 32, %v1446
        %v1448 = vshll.u32 %v1439, %v1446
        %v1449 = vshrl.u32 %v1431, %v1447
        %v1450 = vor.u32 %v1448, %v1449
        %v1451 = vsub.s32 4294967266, %v1446
        %v1452 = vadd.s32 %v1451, 127
        %v1453 = vshll.u32 %v1452, 23
        %v1454 = vor.u32 4788187, %v1453
        %v1455 = vand.u32 2147483647, %v1454
        %v1457 = vcvt.s32.f32 %v1450
        %v1458 = vmul.f32 %v1457, %v1455
        %v1459 = vxor.u32 %v1458, 2147483648
        %v1460 = vsel %vm1377, %v1459, %v1458
        %v1461 = vsub.s32 4, %v1437
        %v1462 = vsel %vm1377, %v1461, %v1437
        %v1463 = vsel %vm1376, %v406, %v1460
        %v1464 = vsel %vm1376, 0, %v1462
        %v1465 = vcosq.f32.pop %v1463
        %v1466 = vsinq.f32.pop %v1463
        %vm1467 = vweird.f32 %v406
        %v1468 = vadd.s32 %v1464, 3
        %v1469 = vand.u32 %v1468, 3
        %vm1470 = vcmp.lt.s32.totalorder %v1469, 2
        %vm1471 = vcmp.eq.s32.totalorder %v1469, 0
        %v1472 = vxor.u32 %v1466, 2147483648
        %v1473 = vsel %vm1471, %v1465, %v1472
        %vm1474 = vcmp.eq.s32.totalorder %v1469, 2
        %v1475 = vxor.u32 %v1465, 2147483648
        %v1476 = vsel %vm1474, %v1475, %v1466
        %v1477 = vsel %vm1470, %v1473, %v1476
        %v1478 = vsel %vm1467, nan, %v1477
        %v1479 = vand.u32 2147483647, %v411
        %vm1480 = vcmp.le.f32.partialorder %v1479, 0.7853982
        %vm1481 = vcmp.lt.s32.totalorder %v411, 0
        %v1482 = vand.u32 %v411, 2139095040
        %v1483 = vshrl.u32 %v1482, 23
        %v1484 = vsub.s32 %v1483, 127
        %v1485 = vand.u32 2147483647, %v411
        %v1486 = vand.u32 %v1485, 8388607
        %v1487 = vor.u32 %v1486, 8388608
        %v1488 = vsub.s32 0, %v1487
        %v1489 = vadd.s32 %v1484, 1
        %vm1490 = vcmp.gt.s32.totalorder %v1489, 0
        %v1491 = vsel %vm1490, %v1489, 0
        %v1492 = vshrl.u32 %v1491, 5
        %v1493 = vand.u32 %v1491, 31
        %v1494 = vsub.s32 32, %v1493
        %v1495 = vshrl.u32 683565275, %v1494
        %v1496 = vshll.u32 683565275, %v1493
        %v1497 = vshrl.u32 2475754826, %v1494
        %v1498 = vor.u32 %v1496, %v1497
        %v1499 = vshll.u32 2475754826, %v1493
        %v1500 = vshrl.u32 2131351028, %v1494
        %v1501 = vor.u32 %v1499, %v1500
        %v1502 = vshll.u32 2131351028, %v1493
        %v1503 = vshrl.u32 2102212464, %v1494
        %v1504 = vor.u32 %v1502, %v1503
        %v1505 = vshll.u32 2102212464, %v1493
        %v1506 = vshrl.u32 920167782, %v1494
        %v1507 = vor.u32 %v1505, %v1506
        %v1508 = vshll.u32 920167782, %v1493
        %v1509 = vshrl.u32 1326507024, %v1494
        %v1510 = vor.u32 %v1508, %v1509
        %vm1511 = vcmp.lt.s32.totalorder %v1492, 1
        %vm1512 = vcmp.lt.s32.totalorder %v1492, 2
        %vm1513 = vcmp.lt.s32.totalorder %v1492, 3
        %vm1514 = vcmp.lt.s32.totalorder %v1492, 4
        %v1515 = vsel %vm1511, %v1495, %v1498
        %v1516 = vsel %vm1514, %v1504, 2102212464
        %v1517 = vsel %vm1513, %v1501, %v1516
        %v1518 = vsel %vm1512, %v1515, %v1517
        %v1519 = vsel %vm1511, %v1498, %v1501
        %v1520 = vsel %vm1514, %v1507, 920167782
        %v1521 = vsel %vm1513, %v1504, %v1520
        %v1522 = vsel %vm1512, %v1519, %v1521
        %v1523 = vsel %vm1511, %v1501, %v1504
        %v1524 = vsel %vm1514, %v1510, 1326507024
        %v1525 = vsel %vm1513, %v1507, %v1524
        %v1526 = vsel %vm1512, %v1523, %v1525
        %v1527 = vshll.u32 %v1487, 8
        %v1528 = vmul.u32.u64.compose %v1527, %v1526
        %v1529 = vextract.low.u32 %v1528
        %v1530 = vextract.high.u32 %v1528
        %v1531 = vmul.u32.u64.compose %v1527, %v1522
        %v1532 = vextract.low.u32 %v1531
        %v1533 = vextract.high.u32 %v1531
        %v1534 = vmul.u32 %v1527, %v1518
        %v1535 = vadd.s32 %v1530, %v1532
        %vm1536 = vc.u32 %v1530, %v1532
        %v1537 = vadd.s32 %v1533, 1
        %v1538 = vsel %vm1536, %v1537, %v1533
        %v1539 = vadd.s32 %v1534, %v1538
        %v1540 = vadd.s32 %v1539, 536870912
        %v1541 = vshrl.u32 %v1540, 30
        %v1542 = vshll.u32 %v1541, 30
        %v1543 = vsub.s32 %v1539, %v1542
        %vm1544 = vcmp.lt.s32.totalorder %v1543, 0
        %v1545 = vsub.s32 0, %v1543
        %v1546 = vsel %vm1544, %v1545, %v1543
        %v1547 = vclz %v1546
        %v1548 = vsub.s32 %v1547, 2
        %vm1549 = vcmp.gt.s32.totalorder 0, %v1548
        %v1550 = vsel %vm1549, 0, %v1548
        %v1551 = vsub.s32 32, %v1550
        %v1552 = vshll.u32 %v1543, %v1550
        %v1553 = vshrl.u32 %v1535, %v1551
        %v1554 = vor.u32 %v1552, %v1553
        %v1555 = vsub.s32 4294967266, %v1550
        %v1556 = vadd.s32 %v1555, 127
        %v1557 = vshll.u32 %v1556, 23
        %v1558 = vor.u32 4788187, %v1557
        %v1559 = vand.u32 2147483647, %v1558
        %v1561 = vcvt.s32.f32 %v1554
        %v1562 = vmul.f32 %v1561, %v1559
        %v1563 = vxor.u32 %v1562, 2147483648
        %v1564 = vsel %vm1481, %v1563, %v1562
        %v1565 = vsub.s32 4, %v1541
        %v1566 = vsel %vm1481, %v1565, %v1541
        %v1567 = vsel %vm1480, %v411, %v1564
        %v1568 = vsel %vm1480, 0, %v1566
        %v1569 = vcosq.f32.pop %v1567
        %v1570 = vsinq.f32.pop %v1567
        %vm1571 = vweird.f32 %v411
        %v1572 = vadd.s32 %v1568, 3
        %v1573 = vand.u32 %v1572, 3
        %vm1574 = vcmp.lt.s32.totalorder %v1573, 2
        %vm1575 = vcmp.eq.s32.totalorder %v1573, 0
        %v1576 = vxor.u32 %v1570, 2147483648
        %v1577 = vsel %vm1575, %v1569, %v1576
        %vm1578 = vcmp.eq.s32.totalorder %v1573, 2
        %v1579 = vxor.u32 %v1569, 2147483648
        %v1580 = vsel %vm1578, %v1579, %v1570
        %v1581 = vsel %vm1574, %v1577, %v1580
        %v1582 = vsel %vm1571, nan, %v1581
        %v1583 = vand.u32 2147483647, %v416
        %vm1584 = vcmp.le.f32.partialorder %v1583, 0.7853982
        %vm1585 = vcmp.lt.s32.totalorder %v416, 0
        %v1586 = vand.u32 %v416, 2139095040
        %v1587 = vshrl.u32 %v1586, 23
        %v1588 = vsub.s32 %v1587, 127
        %v1589 = vand.u32 2147483647, %v416
        %v1590 = vand.u32 %v1589, 8388607
        %v1591 = vor.u32 %v1590, 8388608
        %v1592 = vsub.s32 0, %v1591
        %v1593 = vadd.s32 %v1588, 1
        %vm1594 = vcmp.gt.s32.totalorder %v1593, 0
        %v1595 = vsel %vm1594, %v1593, 0
        %v1596 = vshrl.u32 %v1595, 5
        %v1597 = vand.u32 %v1595, 31
        %v1598 = vsub.s32 32, %v1597
        %v1599 = vshrl.u32 683565275, %v1598
        %v1600 = vshll.u32 683565275, %v1597
        %v1601 = vshrl.u32 2475754826, %v1598
        %v1602 = vor.u32 %v1600, %v1601
        %v1603 = vshll.u32 2475754826, %v1597
        %v1604 = vshrl.u32 2131351028, %v1598
        %v1605 = vor.u32 %v1603, %v1604
        %v1606 = vshll.u32 2131351028, %v1597
        %v1607 = vshrl.u32 2102212464, %v1598
        %v1608 = vor.u32 %v1606, %v1607
        %v1609 = vshll.u32 2102212464, %v1597
        %v1610 = vshrl.u32 920167782, %v1598
        %v1611 = vor.u32 %v1609, %v1610
        %v1612 = vshll.u32 920167782, %v1597
        %v1613 = vshrl.u32 1326507024, %v1598
        %v1614 = vor.u32 %v1612, %v1613
        %vm1615 = vcmp.lt.s32.totalorder %v1596, 1
        %vm1616 = vcmp.lt.s32.totalorder %v1596, 2
        %vm1617 = vcmp.lt.s32.totalorder %v1596, 3
        %vm1618 = vcmp.lt.s32.totalorder %v1596, 4
        %v1619 = vsel %vm1615, %v1599, %v1602
        %v1620 = vsel %vm1618, %v1608, 2102212464
        %v1621 = vsel %vm1617, %v1605, %v1620
        %v1622 = vsel %vm1616, %v1619, %v1621
        %v1623 = vsel %vm1615, %v1602, %v1605
        %v1624 = vsel %vm1618, %v1611, 920167782
        %v1625 = vsel %vm1617, %v1608, %v1624
        %v1626 = vsel %vm1616, %v1623, %v1625
        %v1627 = vsel %vm1615, %v1605, %v1608
        %v1628 = vsel %vm1618, %v1614, 1326507024
        %v1629 = vsel %vm1617, %v1611, %v1628
        %v1630 = vsel %vm1616, %v1627, %v1629
        %v1631 = vshll.u32 %v1591, 8
        %v1632 = vmul.u32.u64.compose %v1631, %v1630
        %v1633 = vextract.low.u32 %v1632
        %v1634 = vextract.high.u32 %v1632
        %v1635 = vmul.u32.u64.compose %v1631, %v1626
        %v1636 = vextract.low.u32 %v1635
        %v1637 = vextract.high.u32 %v1635
        %v1638 = vmul.u32 %v1631, %v1622
        %v1639 = vadd.s32 %v1634, %v1636
        %vm1640 = vc.u32 %v1634, %v1636
        %v1641 = vadd.s32 %v1637, 1
        %v1642 = vsel %vm1640, %v1641, %v1637
        %v1643 = vadd.s32 %v1638, %v1642
        %v1644 = vadd.s32 %v1643, 536870912
        %v1645 = vshrl.u32 %v1644, 30
        %v1646 = vshll.u32 %v1645, 30
        %v1647 = vsub.s32 %v1643, %v1646
        %vm1648 = vcmp.lt.s32.totalorder %v1647, 0
        %v1649 = vsub.s32 0, %v1647
        %v1650 = vsel %vm1648, %v1649, %v1647
        %v1651 = vclz %v1650
        %v1652 = vsub.s32 %v1651, 2
        %vm1653 = vcmp.gt.s32.totalorder 0, %v1652
        %v1654 = vsel %vm1653, 0, %v1652
        %v1655 = vsub.s32 32, %v1654
        %v1656 = vshll.u32 %v1647, %v1654
        %v1657 = vshrl.u32 %v1639, %v1655
        %v1658 = vor.u32 %v1656, %v1657
        %v1659 = vsub.s32 4294967266, %v1654
        %v1660 = vadd.s32 %v1659, 127
        %v1661 = vshll.u32 %v1660, 23
        %v1662 = vor.u32 4788187, %v1661
        %v1663 = vand.u32 2147483647, %v1662
        %v1665 = vcvt.s32.f32 %v1658
        %v1666 = vmul.f32 %v1665, %v1663
        %v1667 = vxor.u32 %v1666, 2147483648
        %v1668 = vsel %vm1585, %v1667, %v1666
        %v1669 = vsub.s32 4, %v1645
        %v1670 = vsel %vm1585, %v1669, %v1645
        %v1671 = vsel %vm1584, %v416, %v1668
        %v1672 = vsel %vm1584, 0, %v1670
        %v1673 = vcosq.f32.pop %v1671
        %v1674 = vsinq.f32.pop %v1671
        %vm1675 = vweird.f32 %v416
        %v1676 = vadd.s32 %v1672, 3
        %v1677 = vand.u32 %v1676, 3
        %vm1678 = vcmp.lt.s32.totalorder %v1677, 2
        %vm1679 = vcmp.eq.s32.totalorder %v1677, 0
        %v1680 = vxor.u32 %v1674, 2147483648
        %v1681 = vsel %vm1679, %v1673, %v1680
        %vm1682 = vcmp.eq.s32.totalorder %v1677, 2
        %v1683 = vxor.u32 %v1673, 2147483648
        %v1684 = vsel %vm1682, %v1683, %v1674
        %v1685 = vsel %vm1678, %v1681, %v1684
        %v1686 = vsel %vm1675, nan, %v1685
        %v1687 = vand.u32 2147483647, %v421
        %vm1688 = vcmp.le.f32.partialorder %v1687, 0.7853982
        %vm1689 = vcmp.lt.s32.totalorder %v421, 0
        %v1690 = vand.u32 %v421, 2139095040
        %v1691 = vshrl.u32 %v1690, 23
        %v1692 = vsub.s32 %v1691, 127
        %v1693 = vand.u32 2147483647, %v421
        %v1694 = vand.u32 %v1693, 8388607
        %v1695 = vor.u32 %v1694, 8388608
        %v1696 = vsub.s32 0, %v1695
        %v1697 = vadd.s32 %v1692, 1
        %vm1698 = vcmp.gt.s32.totalorder %v1697, 0
        %v1699 = vsel %vm1698, %v1697, 0
        %v1700 = vshrl.u32 %v1699, 5
        %v1701 = vand.u32 %v1699, 31
        %v1702 = vsub.s32 32, %v1701
        %v1703 = vshrl.u32 683565275, %v1702
        %v1704 = vshll.u32 683565275, %v1701
        %v1705 = vshrl.u32 2475754826, %v1702
        %v1706 = vor.u32 %v1704, %v1705
        %v1707 = vshll.u32 2475754826, %v1701
        %v1708 = vshrl.u32 2131351028, %v1702
        %v1709 = vor.u32 %v1707, %v1708
        %v1710 = vshll.u32 2131351028, %v1701
        %v1711 = vshrl.u32 2102212464, %v1702
        %v1712 = vor.u32 %v1710, %v1711
        %v1713 = vshll.u32 2102212464, %v1701
        %v1714 = vshrl.u32 920167782, %v1702
        %v1715 = vor.u32 %v1713, %v1714
        %v1716 = vshll.u32 920167782, %v1701
        %v1717 = vshrl.u32 1326507024, %v1702
        %v1718 = vor.u32 %v1716, %v1717
        %vm1719 = vcmp.lt.s32.totalorder %v1700, 1
        %vm1720 = vcmp.lt.s32.totalorder %v1700, 2
        %vm1721 = vcmp.lt.s32.totalorder %v1700, 3
        %vm1722 = vcmp.lt.s32.totalorder %v1700, 4
        %v1723 = vsel %vm1719, %v1703, %v1706
        %v1724 = vsel %vm1722, %v1712, 2102212464
        %v1725 = vsel %vm1721, %v1709, %v1724
        %v1726 = vsel %vm1720, %v1723, %v1725
        %v1727 = vsel %vm1719, %v1706, %v1709
        %v1728 = vsel %vm1722, %v1715, 920167782
        %v1729 = vsel %vm1721, %v1712, %v1728
        %v1730 = vsel %vm1720, %v1727, %v1729
        %v1731 = vsel %vm1719, %v1709, %v1712
        %v1732 = vsel %vm1722, %v1718, 1326507024
        %v1733 = vsel %vm1721, %v1715, %v1732
        %v1734 = vsel %vm1720, %v1731, %v1733
        %v1735 = vshll.u32 %v1695, 8
        %v1736 = vmul.u32.u64.compose %v1735, %v1734
        %v1737 = vextract.low.u32 %v1736
        %v1738 = vextract.high.u32 %v1736
        %v1739 = vmul.u32.u64.compose %v1735, %v1730
        %v1740 = vextract.low.u32 %v1739
        %v1741 = vextract.high.u32 %v1739
        %v1742 = vmul.u32 %v1735, %v1726
        %v1743 = vadd.s32 %v1738, %v1740
        %vm1744 = vc.u32 %v1738, %v1740
        %v1745 = vadd.s32 %v1741, 1
        %v1746 = vsel %vm1744, %v1745, %v1741
        %v1747 = vadd.s32 %v1742, %v1746
        %v1748 = vadd.s32 %v1747, 536870912
        %v1749 = vshrl.u32 %v1748, 30
        %v1750 = vshll.u32 %v1749, 30
        %v1751 = vsub.s32 %v1747, %v1750
        %vm1752 = vcmp.lt.s32.totalorder %v1751, 0
        %v1753 = vsub.s32 0, %v1751
        %v1754 = vsel %vm1752, %v1753, %v1751
        %v1755 = vclz %v1754
        %v1756 = vsub.s32 %v1755, 2
        %vm1757 = vcmp.gt.s32.totalorder 0, %v1756
        %v1758 = vsel %vm1757, 0, %v1756
        %v1759 = vsub.s32 32, %v1758
        %v1760 = vshll.u32 %v1751, %v1758
        %v1761 = vshrl.u32 %v1743, %v1759
        %v1762 = vor.u32 %v1760, %v1761
        %v1763 = vsub.s32 4294967266, %v1758
        %v1764 = vadd.s32 %v1763, 127
        %v1765 = vshll.u32 %v1764, 23
        %v1766 = vor.u32 4788187, %v1765
        %v1767 = vand.u32 2147483647, %v1766
        %v1769 = vcvt.s32.f32 %v1762
        %v1770 = vmul.f32 %v1769, %v1767
        %v1771 = vxor.u32 %v1770, 2147483648
        %v1772 = vsel %vm1689, %v1771, %v1770
        %v1773 = vsub.s32 4, %v1749
        %v1774 = vsel %vm1689, %v1773, %v1749
        %v1775 = vsel %vm1688, %v421, %v1772
        %v1776 = vsel %vm1688, 0, %v1774
        %v1777 = vcosq.f32.pop %v1775
        %v1778 = vsinq.f32.pop %v1775
        %vm1779 = vweird.f32 %v421
        %v1780 = vadd.s32 %v1776, 3
        %v1781 = vand.u32 %v1780, 3
        %vm1782 = vcmp.lt.s32.totalorder %v1781, 2
        %vm1783 = vcmp.eq.s32.totalorder %v1781, 0
        %v1784 = vxor.u32 %v1778, 2147483648
        %v1785 = vsel %vm1783, %v1777, %v1784
        %vm1786 = vcmp.eq.s32.totalorder %v1781, 2
        %v1787 = vxor.u32 %v1777, 2147483648
        %v1788 = vsel %vm1786, %v1787, %v1778
        %v1789 = vsel %vm1782, %v1785, %v1788
        %v1790 = vsel %vm1779, nan, %v1789
        %v1791 = vand.u32 2147483647, %v426
        %vm1792 = vcmp.le.f32.partialorder %v1791, 0.7853982
        %vm1793 = vcmp.lt.s32.totalorder %v426, 0
        %v1794 = vand.u32 %v426, 2139095040
        %v1795 = vshrl.u32 %v1794, 23
        %v1796 = vsub.s32 %v1795, 127
        %v1797 = vand.u32 2147483647, %v426
        %v1798 = vand.u32 %v1797, 8388607
        %v1799 = vor.u32 %v1798, 8388608
        %v1800 = vsub.s32 0, %v1799
        %v1801 = vadd.s32 %v1796, 1
        %vm1802 = vcmp.gt.s32.totalorder %v1801, 0
        %v1803 = vsel %vm1802, %v1801, 0
        %v1804 = vshrl.u32 %v1803, 5
        %v1805 = vand.u32 %v1803, 31
        %v1806 = vsub.s32 32, %v1805
        %v1807 = vshrl.u32 683565275, %v1806
        %v1808 = vshll.u32 683565275, %v1805
        %v1809 = vshrl.u32 2475754826, %v1806
        %v1810 = vor.u32 %v1808, %v1809
        %v1811 = vshll.u32 2475754826, %v1805
        %v1812 = vshrl.u32 2131351028, %v1806
        %v1813 = vor.u32 %v1811, %v1812
        %v1814 = vshll.u32 2131351028, %v1805
        %v1815 = vshrl.u32 2102212464, %v1806
        %v1816 = vor.u32 %v1814, %v1815
        %v1817 = vshll.u32 2102212464, %v1805
        %v1818 = vshrl.u32 920167782, %v1806
        %v1819 = vor.u32 %v1817, %v1818
        %v1820 = vshll.u32 920167782, %v1805
        %v1821 = vshrl.u32 1326507024, %v1806
        %v1822 = vor.u32 %v1820, %v1821
        %vm1823 = vcmp.lt.s32.totalorder %v1804, 1
        %vm1824 = vcmp.lt.s32.totalorder %v1804, 2
        %vm1825 = vcmp.lt.s32.totalorder %v1804, 3
        %vm1826 = vcmp.lt.s32.totalorder %v1804, 4
        %v1827 = vsel %vm1823, %v1807, %v1810
        %v1828 = vsel %vm1826, %v1816, 2102212464
        %v1829 = vsel %vm1825, %v1813, %v1828
        %v1830 = vsel %vm1824, %v1827, %v1829
        %v1831 = vsel %vm1823, %v1810, %v1813
        %v1832 = vsel %vm1826, %v1819, 920167782
        %v1833 = vsel %vm1825, %v1816, %v1832
        %v1834 = vsel %vm1824, %v1831, %v1833
        %v1835 = vsel %vm1823, %v1813, %v1816
        %v1836 = vsel %vm1826, %v1822, 1326507024
        %v1837 = vsel %vm1825, %v1819, %v1836
        %v1838 = vsel %vm1824, %v1835, %v1837
        %v1839 = vshll.u32 %v1799, 8
        %v1840 = vmul.u32.u64.compose %v1839, %v1838
        %v1841 = vextract.low.u32 %v1840
        %v1842 = vextract.high.u32 %v1840
        %v1843 = vmul.u32.u64.compose %v1839, %v1834
        %v1844 = vextract.low.u32 %v1843
        %v1845 = vextract.high.u32 %v1843
        %v1846 = vmul.u32 %v1839, %v1830
        %v1847 = vadd.s32 %v1842, %v1844
        %vm1848 = vc.u32 %v1842, %v1844
        %v1849 = vadd.s32 %v1845, 1
        %v1850 = vsel %vm1848, %v1849, %v1845
        %v1851 = vadd.s32 %v1846, %v1850
        %v1852 = vadd.s32 %v1851, 536870912
        %v1853 = vshrl.u32 %v1852, 30
        %v1854 = vshll.u32 %v1853, 30
        %v1855 = vsub.s32 %v1851, %v1854
        %vm1856 = vcmp.lt.s32.totalorder %v1855, 0
        %v1857 = vsub.s32 0, %v1855
        %v1858 = vsel %vm1856, %v1857, %v1855
        %v1859 = vclz %v1858
        %v1860 = vsub.s32 %v1859, 2
        %vm1861 = vcmp.gt.s32.totalorder 0, %v1860
        %v1862 = vsel %vm1861, 0, %v1860
        %v1863 = vsub.s32 32, %v1862
        %v1864 = vshll.u32 %v1855, %v1862
        %v1865 = vshrl.u32 %v1847, %v1863
        %v1866 = vor.u32 %v1864, %v1865
        %v1867 = vsub.s32 4294967266, %v1862
        %v1868 = vadd.s32 %v1867, 127
        %v1869 = vshll.u32 %v1868, 23
        %v1870 = vor.u32 4788187, %v1869
        %v1871 = vand.u32 2147483647, %v1870
        %v1873 = vcvt.s32.f32 %v1866
        %v1874 = vmul.f32 %v1873, %v1871
        %v1875 = vxor.u32 %v1874, 2147483648
        %v1876 = vsel %vm1793, %v1875, %v1874
        %v1877 = vsub.s32 4, %v1853
        %v1878 = vsel %vm1793, %v1877, %v1853
        %v1879 = vsel %vm1792, %v426, %v1876
        %v1880 = vsel %vm1792, 0, %v1878
        %v1881 = vcosq.f32.pop %v1879
        %v1882 = vsinq.f32.pop %v1879
        %vm1883 = vweird.f32 %v426
        %v1884 = vadd.s32 %v1880, 3
        %v1885 = vand.u32 %v1884, 3
        %vm1886 = vcmp.lt.s32.totalorder %v1885, 2
        %vm1887 = vcmp.eq.s32.totalorder %v1885, 0
        %v1888 = vxor.u32 %v1882, 2147483648
        %v1889 = vsel %vm1887, %v1881, %v1888
        %vm1890 = vcmp.eq.s32.totalorder %v1885, 2
        %v1891 = vxor.u32 %v1881, 2147483648
        %v1892 = vsel %vm1890, %v1891, %v1882
        %v1893 = vsel %vm1886, %v1889, %v1892
        %v1894 = vsel %vm1883, nan, %v1893
        %v1895 = vand.u32 2147483647, %v431
        %vm1896 = vcmp.le.f32.partialorder %v1895, 0.7853982
        %vm1897 = vcmp.lt.s32.totalorder %v431, 0
        %v1898 = vand.u32 %v431, 2139095040
        %v1899 = vshrl.u32 %v1898, 23
        %v1900 = vsub.s32 %v1899, 127
        %v1901 = vand.u32 2147483647, %v431
        %v1902 = vand.u32 %v1901, 8388607
        %v1903 = vor.u32 %v1902, 8388608
        %v1904 = vsub.s32 0, %v1903
        %v1905 = vadd.s32 %v1900, 1
        %vm1906 = vcmp.gt.s32.totalorder %v1905, 0
        %v1907 = vsel %vm1906, %v1905, 0
        %v1908 = vshrl.u32 %v1907, 5
        %v1909 = vand.u32 %v1907, 31
        %v1910 = vsub.s32 32, %v1909
        %v1911 = vshrl.u32 683565275, %v1910
        %v1912 = vshll.u32 683565275, %v1909
        %v1913 = vshrl.u32 2475754826, %v1910
        %v1914 = vor.u32 %v1912, %v1913
        %v1915 = vshll.u32 2475754826, %v1909
        %v1916 = vshrl.u32 2131351028, %v1910
        %v1917 = vor.u32 %v1915, %v1916
        %v1918 = vshll.u32 2131351028, %v1909
        %v1919 = vshrl.u32 2102212464, %v1910
        %v1920 = vor.u32 %v1918, %v1919
        %v1921 = vshll.u32 2102212464, %v1909
        %v1922 = vshrl.u32 920167782, %v1910
        %v1923 = vor.u32 %v1921, %v1922
        %v1924 = vshll.u32 920167782, %v1909
        %v1925 = vshrl.u32 1326507024, %v1910
        %v1926 = vor.u32 %v1924, %v1925
        %vm1927 = vcmp.lt.s32.totalorder %v1908, 1
        %vm1928 = vcmp.lt.s32.totalorder %v1908, 2
        %vm1929 = vcmp.lt.s32.totalorder %v1908, 3
        %vm1930 = vcmp.lt.s32.totalorder %v1908, 4
        %v1931 = vsel %vm1927, %v1911, %v1914
        %v1932 = vsel %vm1930, %v1920, 2102212464
        %v1933 = vsel %vm1929, %v1917, %v1932
        %v1934 = vsel %vm1928, %v1931, %v1933
        %v1935 = vsel %vm1927, %v1914, %v1917
        %v1936 = vsel %vm1930, %v1923, 920167782
        %v1937 = vsel %vm1929, %v1920, %v1936
        %v1938 = vsel %vm1928, %v1935, %v1937
        %v1939 = vsel %vm1927, %v1917, %v1920
        %v1940 = vsel %vm1930, %v1926, 1326507024
        %v1941 = vsel %vm1929, %v1923, %v1940
        %v1942 = vsel %vm1928, %v1939, %v1941
        %v1943 = vshll.u32 %v1903, 8
        %v1944 = vmul.u32.u64.compose %v1943, %v1942
        %v1945 = vextract.low.u32 %v1944
        %v1946 = vextract.high.u32 %v1944
        %v1947 = vmul.u32.u64.compose %v1943, %v1938
        %v1948 = vextract.low.u32 %v1947
        %v1949 = vextract.high.u32 %v1947
        %v1950 = vmul.u32 %v1943, %v1934
        %v1951 = vadd.s32 %v1946, %v1948
        %vm1952 = vc.u32 %v1946, %v1948
        %v1953 = vadd.s32 %v1949, 1
        %v1954 = vsel %vm1952, %v1953, %v1949
        %v1955 = vadd.s32 %v1950, %v1954
        %v1956 = vadd.s32 %v1955, 536870912
        %v1957 = vshrl.u32 %v1956, 30
        %v1958 = vshll.u32 %v1957, 30
        %v1959 = vsub.s32 %v1955, %v1958
        %vm1960 = vcmp.lt.s32.totalorder %v1959, 0
        %v1961 = vsub.s32 0, %v1959
        %v1962 = vsel %vm1960, %v1961, %v1959
        %v1963 = vclz %v1962
        %v1964 = vsub.s32 %v1963, 2
        %vm1965 = vcmp.gt.s32.totalorder 0, %v1964
        %v1966 = vsel %vm1965, 0, %v1964
        %v1967 = vsub.s32 32, %v1966
        %v1968 = vshll.u32 %v1959, %v1966
        %v1969 = vshrl.u32 %v1951, %v1967
        %v1970 = vor.u32 %v1968, %v1969
        %v1971 = vsub.s32 4294967266, %v1966
        %v1972 = vadd.s32 %v1971, 127
        %v1973 = vshll.u32 %v1972, 23
        %v1974 = vor.u32 4788187, %v1973
        %v1975 = vand.u32 2147483647, %v1974
        %v1977 = vcvt.s32.f32 %v1970
        %v1978 = vmul.f32 %v1977, %v1975
        %v1979 = vxor.u32 %v1978, 2147483648
        %v1980 = vsel %vm1897, %v1979, %v1978
        %v1981 = vsub.s32 4, %v1957
        %v1982 = vsel %vm1897, %v1981, %v1957
        %v1983 = vsel %vm1896, %v431, %v1980
        %v1984 = vsel %vm1896, 0, %v1982
        %v1985 = vcosq.f32.pop %v1983
        %v1986 = vsinq.f32.pop %v1983
        %vm1987 = vweird.f32 %v431
        %v1988 = vadd.s32 %v1984, 3
        %v1989 = vand.u32 %v1988, 3
        %vm1990 = vcmp.lt.s32.totalorder %v1989, 2
        %vm1991 = vcmp.eq.s32.totalorder %v1989, 0
        %v1992 = vxor.u32 %v1986, 2147483648
        %v1993 = vsel %vm1991, %v1985, %v1992
        %vm1994 = vcmp.eq.s32.totalorder %v1989, 2
        %v1995 = vxor.u32 %v1985, 2147483648
        %v1996 = vsel %vm1994, %v1995, %v1986
        %v1997 = vsel %vm1990, %v1993, %v1996
        %v1998 = vsel %vm1987, nan, %v1997
        %v1999 = vand.u32 2147483647, %v436
        %vm2000 = vcmp.le.f32.partialorder %v1999, 0.7853982
        %vm2001 = vcmp.lt.s32.totalorder %v436, 0
        %v2002 = vand.u32 %v436, 2139095040
        %v2003 = vshrl.u32 %v2002, 23
        %v2004 = vsub.s32 %v2003, 127
        %v2005 = vand.u32 2147483647, %v436
        %v2006 = vand.u32 %v2005, 8388607
        %v2007 = vor.u32 %v2006, 8388608
        %v2008 = vsub.s32 0, %v2007
        %v2009 = vadd.s32 %v2004, 1
        %vm2010 = vcmp.gt.s32.totalorder %v2009, 0
        %v2011 = vsel %vm2010, %v2009, 0
        %v2012 = vshrl.u32 %v2011, 5
        %v2013 = vand.u32 %v2011, 31
        %v2014 = vsub.s32 32, %v2013
        %v2015 = vshrl.u32 683565275, %v2014
        %v2016 = vshll.u32 683565275, %v2013
        %v2017 = vshrl.u32 2475754826, %v2014
        %v2018 = vor.u32 %v2016, %v2017
        %v2019 = vshll.u32 2475754826, %v2013
        %v2020 = vshrl.u32 2131351028, %v2014
        %v2021 = vor.u32 %v2019, %v2020
        %v2022 = vshll.u32 2131351028, %v2013
        %v2023 = vshrl.u32 2102212464, %v2014
        %v2024 = vor.u32 %v2022, %v2023
        %v2025 = vshll.u32 2102212464, %v2013
        %v2026 = vshrl.u32 920167782, %v2014
        %v2027 = vor.u32 %v2025, %v2026
        %v2028 = vshll.u32 920167782, %v2013
        %v2029 = vshrl.u32 1326507024, %v2014
        %v2030 = vor.u32 %v2028, %v2029
        %vm2031 = vcmp.lt.s32.totalorder %v2012, 1
        %vm2032 = vcmp.lt.s32.totalorder %v2012, 2
        %vm2033 = vcmp.lt.s32.totalorder %v2012, 3
        %vm2034 = vcmp.lt.s32.totalorder %v2012, 4
        %v2035 = vsel %vm2031, %v2015, %v2018
        %v2036 = vsel %vm2034, %v2024, 2102212464
        %v2037 = vsel %vm2033, %v2021, %v2036
        %v2038 = vsel %vm2032, %v2035, %v2037
        %v2039 = vsel %vm2031, %v2018, %v2021
        %v2040 = vsel %vm2034, %v2027, 920167782
        %v2041 = vsel %vm2033, %v2024, %v2040
        %v2042 = vsel %vm2032, %v2039, %v2041
        %v2043 = vsel %vm2031, %v2021, %v2024
        %v2044 = vsel %vm2034, %v2030, 1326507024
        %v2045 = vsel %vm2033, %v2027, %v2044
        %v2046 = vsel %vm2032, %v2043, %v2045
        %v2047 = vshll.u32 %v2007, 8
        %v2048 = vmul.u32.u64.compose %v2047, %v2046
        %v2049 = vextract.low.u32 %v2048
        %v2050 = vextract.high.u32 %v2048
        %v2051 = vmul.u32.u64.compose %v2047, %v2042
        %v2052 = vextract.low.u32 %v2051
        %v2053 = vextract.high.u32 %v2051
        %v2054 = vmul.u32 %v2047, %v2038
        %v2055 = vadd.s32 %v2050, %v2052
        %vm2056 = vc.u32 %v2050, %v2052
        %v2057 = vadd.s32 %v2053, 1
        %v2058 = vsel %vm2056, %v2057, %v2053
        %v2059 = vadd.s32 %v2054, %v2058
        %v2060 = vadd.s32 %v2059, 536870912
        %v2061 = vshrl.u32 %v2060, 30
        %v2062 = vshll.u32 %v2061, 30
        %v2063 = vsub.s32 %v2059, %v2062
        %vm2064 = vcmp.lt.s32.totalorder %v2063, 0
        %v2065 = vsub.s32 0, %v2063
        %v2066 = vsel %vm2064, %v2065, %v2063
        %v2067 = vclz %v2066
        %v2068 = vsub.s32 %v2067, 2
        %vm2069 = vcmp.gt.s32.totalorder 0, %v2068
        %v2070 = vsel %vm2069, 0, %v2068
        %v2071 = vsub.s32 32, %v2070
        %v2072 = vshll.u32 %v2063, %v2070
        %v2073 = vshrl.u32 %v2055, %v2071
        %v2074 = vor.u32 %v2072, %v2073
        %v2075 = vsub.s32 4294967266, %v2070
        %v2076 = vadd.s32 %v2075, 127
        %v2077 = vshll.u32 %v2076, 23
        %v2078 = vor.u32 4788187, %v2077
        %v2079 = vand.u32 2147483647, %v2078
        %v2081 = vcvt.s32.f32 %v2074
        %v2082 = vmul.f32 %v2081, %v2079
        %v2083 = vxor.u32 %v2082, 2147483648
        %v2084 = vsel %vm2001, %v2083, %v2082
        %v2085 = vsub.s32 4, %v2061
        %v2086 = vsel %vm2001, %v2085, %v2061
        %v2087 = vsel %vm2000, %v436, %v2084
        %v2088 = vsel %vm2000, 0, %v2086
        %v2089 = vcosq.f32.pop %v2087
        %v2090 = vsinq.f32.pop %v2087
        %vm2091 = vweird.f32 %v436
        %v2092 = vadd.s32 %v2088, 3
        %v2093 = vand.u32 %v2092, 3
        %vm2094 = vcmp.lt.s32.totalorder %v2093, 2
        %vm2095 = vcmp.eq.s32.totalorder %v2093, 0
        %v2096 = vxor.u32 %v2090, 2147483648
        %v2097 = vsel %vm2095, %v2089, %v2096
        %vm2098 = vcmp.eq.s32.totalorder %v2093, 2
        %v2099 = vxor.u32 %v2089, 2147483648
        %v2100 = vsel %vm2098, %v2099, %v2090
        %v2101 = vsel %vm2094, %v2097, %v2100
        %v2102 = vsel %vm2091, nan, %v2101
        %2103 = vst [vmem:[%s241] sm:$0xff] %v542
        %2104 = vst [vmem:[%s241 + $0x8] sm:$0xff] %v646
        %2105 = vst [vmem:[%s241 + $0x10] sm:$0xff] %v750
        %2106 = vst [vmem:[%s241 + $0x18] sm:$0xff] %v854
        %2107 = vst [vmem:[%s241 + $0x20] sm:$0xff] %v958
        %2108 = vst [vmem:[%s241 + $0x28] sm:$0xff] %v1062
        %2109 = vst [vmem:[%s241 + $0x30] sm:$0xff] %v1166
        %2110 = vst [vmem:[%s241 + $0x38] sm:$0xff] %v1270
        %2111 = vst [vmem:[%s241 + $0x40] sm:$0xff] %v1374
        %2112 = vst [vmem:[%s241 + $0x48] sm:$0xff] %v1478
        %2113 = vst [vmem:[%s241 + $0x50] sm:$0xff] %v1582
        %2114 = vst [vmem:[%s241 + $0x58] sm:$0xff] %v1686
        %2115 = vst [vmem:[%s241 + $0x60] sm:$0xff] %v1790
        %2116 = vst [vmem:[%s241 + $0x68] sm:$0xff] %v1894
        %2117 = vst [vmem:[%s241 + $0x70] sm:$0xff] %v1998
        %2118 = vst [vmem:[%s241 + $0x78] sm:$0xff] %v2102
        %s2119 = sand.u32 %s121, 1
        %s2120 = scalar_lea.sflag [#allocation4], %s2119
        %s2121 = sand.u32 %s121, 1
        %s2122 = smul.addr %s2121, 128
        %s2123 = scalar_lea.vmem [#allocation7], %s2122
        // Predicated region
        $region41: #{tpu_custom_call.1} parent=31 // pred_check
          %p2124 = pneg %p131
        $region42: #{tpu_custom_call.1} parent=31 // pred_check_branch
          %2126 = sbr.rel (%p2124) target = $region44
        $region43: #{tpu_custom_call.1} parent=31 // pred_region
          %s2127 = smul.u32 16, %s25
          %s2128 = ssub.s32 25, %s2127
          %p2129 = scmp.lt.s32.totalorder %s2128, 16
          %s2130 = scalar_select %p2129, %s2128, 16
          %s2131 = smul.u32 128, %s2130
          %s2133 = ssub.s32 2048, %s2131
          %2134 = vsyncadd %s2120, %s2133
          %p2135 = scmp.ne.s32.totalorder 0, %s2131
          %s2136 = sadd.s32 %s26, %s2127
          %s2137 = smul.addr %s2136, 128
          %s2138 = scalar_lea.hbm %s3, %s2137
          %s2139 = smul.u32 8, %s2130
          %s2140 = sshll.u32 %s2123, 4
          %s2141 = int_to_ptr.vmem [resolvable:$true] %s2140
          %s2142 = sshll.u32 %s2139, 4
          %2146 = dma.vmem_to_hbm [thread:$0]  (%p2135), %s2141, %s2142, %s2138, %s2120, 128, 128, 8
        $region44: #{tpu_custom_call.1} parent=31 // pred_fallthru
          _
      $region32: #{tpu_custom_call.1} parent=5 // pred_fallthru
        _
      %p2147 = scmp.le.s32.totalorder 2, %s16
      // Predicated region
      $region45: #{tpu_custom_call.1} parent=5 // pred_check
        %p2148 = pneg %p2147
      $region46: #{tpu_custom_call.1} parent=5 // pred_check_branch
        %2150 = sbr.rel (%p2148) target = $region48
      $region47: #{tpu_custom_call.1} parent=5 // pred_region
        %s2151 = ssub.s32 %s16, 2
        // Predicated region
        $region49: #{tpu_custom_call.1} parent=47 // pred_check
          %p2152 = pneg %p137
        $region50: #{tpu_custom_call.1} parent=47 // pred_check_branch
          %2154 = sbr.rel (%p2152) target = $region52
        $region51: #{tpu_custom_call.1} parent=47 // pred_region
          %s2155 = sand.u32 %s122, 1
          %s2156 = scalar_lea.sflag [#allocation4], %s2155
          %s2157 = sand.u32 %s122, 1
          %s2158 = smul.addr %s2157, 128
          %s2159 = scalar_lea.vmem [#allocation7], %s2158
          %2160 = dma.done %s2156, 2048
        $region52: #{tpu_custom_call.1} parent=47 // pred_fallthru
          _
      $region48: #{tpu_custom_call.1} parent=5 // pred_fallthru
        _
    $region6: #{tpu_custom_call.1} parent=1 // loop_footer
      %s20 = sadd.s32 1, %s16
    $region7: #{tpu_custom_call.1} parent=1 // loop_footer_branch
      %15 = sbr.rel target = $region3
    $region8: #{tpu_custom_call.1} parent=1 // loop_exit
      _
    %2161 = vsyncpa [#allocation3], 1
    %s2162 = scalar_lea.sflag [#allocation3], 1
    %2163 = vsyncpa %s2162, 1
    %2164 = vsyncpa [#allocation6], 1
    %2165 = vsyncpa [#allocation4], 1
    %s2166 = scalar_lea.sflag [#allocation4], 1
    %2167 = vsyncpa %s2166, 1

</llo_original>
